<compile_context>
chip_gen: v7x
topology: tpu7x:2x2x1
jax: 0.10.0
libtpu: 0.0.40
codegen_flags: <defaults>
</compile_context>

<pallas_src>
from functools import partial

import numpy as np
import jax
import jax.numpy as jnp
from jax import lax
from jax.experimental import pallas as pl
from jax.experimental.pallas import tpu as pltpu

EPS = 1e-5


# ----------------------------------------------------------------------------
# Fused Pallas kernel (one grid step = one group of G images)
# ----------------------------------------------------------------------------
def _bottleneck_kernel(has_shortcut, c2, gm2, *refs):
    if has_shortcut:
        (x_ref, s_ref, w1_ref, b1_ref, w2_ref, b2_ref,
         w3_ref, b3_ref, ws_ref, bs_ref, o_ref, gstk_ref) = refs
    else:
        (x_ref, s_ref, w1_ref, b1_ref, w2_ref, b2_ref,
         w3_ref, b3_ref, o_ref, gstk_ref) = refs

    xt = x_ref[0]                                            # [Cin, G*M1]

    # conv1 (1x1) + folded BN + ReLU                        -> [C2, G*M1]
    a1 = jnp.dot(w1_ref[...], xt, preferred_element_type=jnp.float32)
    a1 = jnp.maximum(a1 + b1_ref[...], 0.0)

    # conv2 (3x3, stride s, pad 1):
    # (1) ONE wide gather matmul over all 9 taps (exact 0/1 selection matrix,
    #     f32 -> no upconverts), lanes = 9*G*M2             -> [C2, 9*G*M2]
    gat = jnp.dot(a1, s_ref[...], preferred_element_type=jnp.float32)
    # (2) restack the taps onto the contraction (sublane) axis through a small
    #     VMEM scratch; all slices static and lane/sublane aligned.
    for t in range(9):                                       # static unroll
        gstk_ref[t * c2:(t + 1) * c2, :] = gat[:, t * gm2:(t + 1) * gm2]
    # (3) ONE fused tap-weight matmul, K = 9*C2 (MXU-internal accumulation)
    a2 = jnp.dot(w2_ref[...], gstk_ref[...], preferred_element_type=jnp.float32)
    a2 = jnp.maximum(a2 + b2_ref[...], 0.0)                  # [C2, G*M2]

    # conv3 (1x1) + folded BN (ReLU only after the residual add)
    r = jnp.dot(w3_ref[...], a2, preferred_element_type=jnp.float32) + b3_ref[...]

    # shortcut branch
    if has_shortcut:
        # 1x1 stride-s conv: the centre tap (t=4) of the gather selects exactly
        # the strided pixels (s*oh, s*ow) the shortcut needs.
        xs = jnp.dot(xt, s_ref[:, 4 * gm2:5 * gm2],
                     preferred_element_type=jnp.float32)     # [Cin, G*M2]
        sc = jnp.dot(ws_ref[...], xs,
                     preferred_element_type=jnp.float32) + bs_ref[...]
    else:
        sc = xt    # identity: stride==1 and Cin==Cexp (asserted in wrapper)

    # residual add + final ReLU; 128-lane-dense store (unmasked vst)
    o_ref[0] = jnp.maximum(r + sc, 0.0)                      # [Cexp, G*M2]


# ----------------------------------------------------------------------------
# Wrapper: layout plumbing, BN folding, gather-matrix construction
# ----------------------------------------------------------------------------
def _build_group_gather(h, w, stride, g):
    """Selection matrix S_grp[G*M1, 9*G*M2] (f32, exact 0/1) such that
    S_grp[gi*M1 + m1, t*G*M2 + gi*M2 + m2] = 1 iff tap t=(dh*3+dw) of output
    pixel m2=(oh*Wo+ow) of image gi reads input pixel m1=(ih*W+iw) for a
    3x3 / pad=1 / stride=s convolution (block-diagonal over the G images of a
    group, taps concatenated tap-major along the lanes)."""
    ho = (h + 2 - 3) // stride + 1
    wo = (w + 2 - 3) // stride + 1
    m1, m2 = h * w, ho * wo
    s = np.zeros((9, m1, m2), np.float32)
    for dh in range(3):
        for dw in range(3):
            t = dh * 3 + dw
            for oh in range(ho):
                ih = stride * oh - 1 + dh
                if ih < 0 or ih >= h:
                    continue
                for ow in range(wo):
                    iw = stride * ow - 1 + dw
                    if iw < 0 or iw >= w:
                        continue
                    s[t, ih * w + iw, oh * wo + ow] = 1.0
    sg = np.zeros((g * m1, 9 * g * m2), np.float32)
    for t in range(9):
        for gi in range(g):
            sg[gi * m1:(gi + 1) * m1,
               t * g * m2 + gi * m2: t * g * m2 + (gi + 1) * m2] = s[t]
    return jnp.asarray(sg), ho, wo


def _fold_bn(w_oihw, bn):
    """Fold inference BatchNorm into the conv weight (scale) + a bias."""
    gamma, beta, mean, var = bn
    scale = gamma / jnp.sqrt(var + EPS)
    w = (w_oihw * scale[:, None, None, None]).astype(jnp.float32)
    bias = (beta - mean * scale).astype(jnp.float32).reshape(-1, 1)
    return w, bias


def bottleneck_forward(x_nchw, params, *, stride, has_shortcut):
    n, cin, h, w = x_nchw.shape
    ho = (h + 2 - 3) // stride + 1
    wo = (w + 2 - 3) // stride + 1
    m1, m2 = h * w, ho * wo

    # Pack g images per grid step on the lane axis so stores are >=128 lanes
    # whenever possible; for tiny N this collapses the batch grid to 1 step.
    g = 1
    if m2 < 128:
        g = max(1, min(n, 128 // m2))
        while n % g != 0:
            g -= 1
    num_groups = n // g
    gm1, gm2 = g * m1, g * m2

    s_grp, ho, wo = _build_group_gather(h, w, stride, g)     # [G*M1, 9*G*M2]

    w1, b1 = _fold_bn(params["w1"], params["bn1"])
    w2, b2 = _fold_bn(params["w2"], params["bn2"])
    w3, b3 = _fold_bn(params["w3"], params["bn3"])
    c2 = w1.shape[0]
    cexp = w3.shape[0]
    w1m = w1[:, :, 0, 0]                                      # [C2, Cin]
    # conv2 weights with taps on the contraction axis, tap-major (col = t*C2+ci),
    # matching the scratch restack order in the kernel.
    w2c = jnp.transpose(w2.reshape(c2, c2, 9), (0, 2, 1)).reshape(c2, 9 * c2)
    w3m = w3[:, :, 0, 0]                                      # [Cexp, C2]

    if not has_shortcut:
        assert stride == 1 and cin == cexp, (
            "identity shortcut requires stride==1 and "
            "in_channels == out_channels * expansion")

    # channel-major, images of a group concatenated on the pixel/lane axis
    xt = (x_nchw.reshape(num_groups, g, cin, m1)
                .transpose(0, 2, 1, 3)
                .reshape(num_groups, cin, gm1)
                .astype(jnp.float32))

    args = [xt, s_grp, w1m, b1, w2c, b2, w3m, b3]
    in_specs = [
        pl.BlockSpec((1, cin, gm1), lambda i: (i, 0, 0)),     # per-group slab
        pl.BlockSpec(s_grp.shape, lambda i: (0, 0)),          # grid-invariant
        pl.BlockSpec(w1m.shape, lambda i: (0, 0)),
        pl.BlockSpec(b1.shape, lambda i: (0, 0)),
        pl.BlockSpec(w2c.shape, lambda i: (0, 0)),
        pl.BlockSpec(b2.shape, lambda i: (0, 0)),
        pl.BlockSpec(w3m.shape, lambda i: (0, 0)),
        pl.BlockSpec(b3.shape, lambda i: (0, 0)),
    ]
    flops = 2 * num_groups * (c2 * cin * gm1          # conv1
                              + c2 * gm1 * 9 * gm2    # fused tap gather
                              + c2 * 9 * c2 * gm2     # fused tap weights
                              + cexp * c2 * gm2)      # conv3
    if has_shortcut:
        ws, bs = _fold_bn(params["ws"], params["bns"])
        wsm = ws[:, :, 0, 0]                                  # [Cexp, Cin]
        args += [wsm, bs]
        in_specs += [pl.BlockSpec(wsm.shape, lambda i: (0, 0)),
                     pl.BlockSpec(bs.shape, lambda i: (0, 0))]
        flops += 2 * num_groups * (cin * gm1 * gm2 + cexp * cin * gm2)

    bytes_accessed = int(xt.size * 4 + s_grp.size * 4 + n * cexp * m2 * 4
                         + sum(int(a.size) * 4 for a in args[2:]))

    out = pl.pallas_call(
        partial(_bottleneck_kernel, has_shortcut, c2, gm2),
        out_shape=jax.ShapeDtypeStruct((num_groups, cexp, gm2), jnp.float32),
        grid=(num_groups,),
        in_specs=in_specs,
        out_specs=pl.BlockSpec((1, cexp, gm2), lambda i: (i, 0, 0)),
        scratch_shapes=[pltpu.VMEM((9 * c2, gm2), jnp.float32)],
        compiler_params=pltpu.CompilerParams(
            dimension_semantics=("parallel",)),               # v7x: groups -> 2 TCs
        cost_estimate=pl.CostEstimate(flops=int(flops), transcendentals=0,
                                      bytes_accessed=bytes_accessed),
    )(*args)

    # [num_groups, Cexp, G*M2] -> NCHW
    return (out.reshape(num_groups, cexp, g, m2)
               .transpose(0, 2, 1, 3)
               .reshape(n, cexp, ho, wo))


# ----------------------------------------------------------------------------
# Pure-JAX reference (for correctness check)
# ----------------------------------------------------------------------------
def _conv_ref(x, w, stride, padding):
    return lax.conv_general_dilated(
        x, w, window_strides=(stride, stride),
        padding=[(padding, padding), (padding, padding)],
        dimension_numbers=("NCHW", "OIHW", "NCHW"))


def _bn_ref(x, bn):
    gamma, beta, mean, var = bn
    return ((x - mean[None, :, None, None])
            / jnp.sqrt(var[None, :, None, None] + EPS)
            * gamma[None, :, None, None] + beta[None, :, None, None])


def bottleneck_ref(x, params, *, stride, has_shortcut):
    r = jax.nn.relu(_bn_ref(_conv_ref(x, params["w1"], 1, 0), params["bn1"]))
    r = jax.nn.relu(_bn_ref(_conv_ref(r, params["w2"], stride, 1), params["bn2"]))
    r = _bn_ref(_conv_ref(r, params["w3"], 1, 0), params["bn3"])
    if has_shortcut:
        s = _bn_ref(_conv_ref(x, params["ws"], stride, 0), params["bns"])
    else:
        s = x
    return jax.nn.relu(r + s)


# ----------------------------------------------------------------------------
# Deterministic parameter construction
# ----------------------------------------------------------------------------
def make_bn(key, c):
    k1, k2, k3, k4 = jax.random.split(key, 4)
    gamma = jax.random.uniform(k1, (c,), jnp.float32, 0.5, 1.5)
    beta = jax.random.normal(k2, (c,), jnp.float32) * 0.1
    mean = jax.random.normal(k3, (c,), jnp.float32) * 0.1
    var = jax.random.uniform(k4, (c,), jnp.float32, 0.5, 1.5)
    return gamma, beta, mean, var


def make_params(key, in_channels, out_channels, expansion=4):
    keys = jax.random.split(key, 8)
    cexp = out_channels * expansion
    return {
        "w1": jax.random.normal(keys[0], (out_channels, in_channels, 1, 1),
                                jnp.float32) * 0.1,
        "bn1": make_bn(keys[1], out_channels),
        "w2": jax.random.normal(keys[2], (out_channels, out_channels, 3, 3),
                                jnp.float32) * 0.1,
        "bn2": make_bn(keys[3], out_channels),
        "w3": jax.random.normal(keys[4], (cexp, out_channels, 1, 1),
                                jnp.float32) * 0.1,
        "bn3": make_bn(keys[5], cexp),
        "ws": jax.random.normal(keys[6], (cexp, in_channels, 1, 1),
                                jnp.float32) * 0.1,
        "bns": make_bn(keys[7], cexp),
    }


# ----------------------------------------------------------------------------
if __name__ == "__main__":
    # Module config: BottleNeck(in_channels=16, out_channels=8, stride=2)
    in_channels, out_channels, stride, expansion = 16, 8, 2, 4
    has_shortcut = (stride != 1) or (in_channels != out_channels * expansion)

    key = jax.random.PRNGKey(0)
    kx, kp = jax.random.split(key)
    x = jax.random.normal(kx, (2, in_channels, 16, 16), jnp.float32)  # NCHW
    params = make_params(kp, in_channels, out_channels, expansion)

    fwd = jax.jit(partial(bottleneck_forward, stride=stride,
                          has_shortcut=has_shortcut))
    out = jax.block_until_ready(fwd(x, params))

    ref = jax.block_until_ready(
        bottleneck_ref(x, params, stride=stride, has_shortcut=has_shortcut))

    np.testing.assert_allclose(np.asarray(out), np.asarray(ref),
                               rtol=1e-3, atol=1e-3)
    print("KERNEL_OK")
</pallas_src>

<mosaic_0001>
module attributes {stable_mosaic.version = 11 : i64} {
  func.func @_bottleneck_kernel(%arg0: i32, %arg1: memref<1x16x512xf32, #tpu.memory_space<vmem>>, %arg2: memref<512x1152xf32, #tpu.memory_space<vmem>>, %arg3: memref<8x16xf32, #tpu.memory_space<vmem>>, %arg4: memref<8x1xf32, #tpu.memory_space<vmem>>, %arg5: memref<8x72xf32, #tpu.memory_space<vmem>>, %arg6: memref<8x1xf32, #tpu.memory_space<vmem>>, %arg7: memref<32x8xf32, #tpu.memory_space<vmem>>, %arg8: memref<32x1xf32, #tpu.memory_space<vmem>>, %arg9: memref<32x16xf32, #tpu.memory_space<vmem>>, %arg10: memref<32x1xf32, #tpu.memory_space<vmem>>, %arg11: memref<1x32x128xf32, #tpu.memory_space<vmem>>, %arg12: memref<72x128xf32, #tpu.memory_space<vmem>>) attributes {dimension_semantics = [#tpu.dimension_semantics<parallel>], iteration_bounds = array<i64: 1>, scalar_prefetch = 0 : i64, scratch_operands = 1 : i64, tpu.core_type = #tpu.core_type<tc>, window_params = [{transform_indices = @transform_0, window_bounds = array<i64: 1, 16, 512>}, {pipeline_mode = #tpu.pipeline_mode<synchronous>, transform_indices = @transform_1, window_bounds = array<i64: 512, 1152>}, {pipeline_mode = #tpu.pipeline_mode<synchronous>, transform_indices = @transform_2, window_bounds = array<i64: 8, 16>}, {pipeline_mode = #tpu.pipeline_mode<synchronous>, transform_indices = @transform_3, window_bounds = array<i64: 8, 1>}, {pipeline_mode = #tpu.pipeline_mode<synchronous>, transform_indices = @transform_4, window_bounds = array<i64: 8, 72>}, {pipeline_mode = #tpu.pipeline_mode<synchronous>, transform_indices = @transform_5, window_bounds = array<i64: 8, 1>}, {pipeline_mode = #tpu.pipeline_mode<synchronous>, transform_indices = @transform_6, window_bounds = array<i64: 32, 8>}, {pipeline_mode = #tpu.pipeline_mode<synchronous>, transform_indices = @transform_7, window_bounds = array<i64: 32, 1>}, {pipeline_mode = #tpu.pipeline_mode<synchronous>, transform_indices = @transform_8, window_bounds = array<i64: 32, 16>}, {pipeline_mode = #tpu.pipeline_mode<synchronous>, transform_indices = @transform_9, window_bounds = array<i64: 32, 1>}, {transform_indices = @transform_10, window_bounds = array<i64: 1, 32, 128>}]} {
    %c0 = arith.constant 0 : index
    %c0_0 = arith.constant 0 : index
    %c0_1 = arith.constant 0 : index
    %0 = vector.load %arg1[%c0, %c0_0, %c0_1] : memref<1x16x512xf32, #tpu.memory_space<vmem>>, vector<1x16x512xf32>
    %1 = vector.shape_cast %0 : vector<1x16x512xf32> to vector<16x512xf32>
    %c0_2 = arith.constant 0 : index
    %c0_3 = arith.constant 0 : index
    %2 = vector.load %arg3[%c0_2, %c0_3] : memref<8x16xf32, #tpu.memory_space<vmem>>, vector<8x16xf32>
    %cst = arith.constant dense<0.000000e+00> : vector<8x512xf32>
    %3 = tpu.matmul %2, %1, %cst {dimension_numbers = #tpu.dot_dimension_numbers<[1], [0], [0], [1], [0, 0, 1, 1], [], []>} : vector<8x16xf32>, vector<16x512xf32>, vector<8x512xf32> -> vector<8x512xf32>
    %c0_4 = arith.constant 0 : index
    %c0_5 = arith.constant 0 : index
    %4 = vector.load %arg4[%c0_4, %c0_5] : memref<8x1xf32, #tpu.memory_space<vmem>>, vector<8x1xf32>
    %5 = vector.broadcast %4 : vector<8x1xf32> to vector<8x512xf32>
    %6 = arith.addf %3, %5 : vector<8x512xf32>
    %cst_6 = arith.constant 0.000000e+00 : f32
    %7 = vector.broadcast %cst_6 : f32 to vector<8x512xf32>
    %8 = arith.maximumf %6, %7 : vector<8x512xf32>
    %c0_7 = arith.constant 0 : index
    %c0_8 = arith.constant 0 : index
    %9 = vector.load %arg2[%c0_7, %c0_8] : memref<512x1152xf32, #tpu.memory_space<vmem>>, vector<512x1152xf32>
    %cst_9 = arith.constant dense<0.000000e+00> : vector<8x1152xf32>
    %10 = tpu.matmul %8, %9, %cst_9 {dimension_numbers = #tpu.dot_dimension_numbers<[1], [0], [0], [1], [0, 0, 1, 1], [], []>} : vector<8x512xf32>, vector<512x1152xf32>, vector<8x1152xf32> -> vector<8x1152xf32>
    %11 = vector.extract_strided_slice %10 {offsets = [0, 0], sizes = [8, 128], strides = [1, 1]} : vector<8x1152xf32> to vector<8x128xf32>
    %c0_10 = arith.constant 0 : index
    %c0_11 = arith.constant 0 : index
    %12 = vector.load %arg12[%c0_10, %c0_11] : memref<72x128xf32, #tpu.memory_space<vmem>>, vector<8x128xf32>
    tpu.vector_store %arg12[%c0_10, %c0_11], %11 {strides = array<i32>} : memref<72x128xf32, #tpu.memory_space<vmem>>, vector<8x128xf32>,
    %13 = vector.extract_strided_slice %10 {offsets = [0, 128], sizes = [8, 128], strides = [1, 1]} : vector<8x1152xf32> to vector<8x128xf32>
    %c8 = arith.constant 8 : index
    %c0_12 = arith.constant 0 : index
    %14 = vector.load %arg12[%c8, %c0_12] : memref<72x128xf32, #tpu.memory_space<vmem>>, vector<8x128xf32>
    tpu.vector_store %arg12[%c8, %c0_12], %13 {strides = array<i32>} : memref<72x128xf32, #tpu.memory_space<vmem>>, vector<8x128xf32>,
    %15 = vector.extract_strided_slice %10 {offsets = [0, 256], sizes = [8, 128], strides = [1, 1]} : vector<8x1152xf32> to vector<8x128xf32>
    %c16 = arith.constant 16 : index
    %c0_13 = arith.constant 0 : index
    %16 = vector.load %arg12[%c16, %c0_13] : memref<72x128xf32, #tpu.memory_space<vmem>>, vector<8x128xf32>
    tpu.vector_store %arg12[%c16, %c0_13], %15 {strides = array<i32>} : memref<72x128xf32, #tpu.memory_space<vmem>>, vector<8x128xf32>,
    %17 = vector.extract_strided_slice %10 {offsets = [0, 384], sizes = [8, 128], strides = [1, 1]} : vector<8x1152xf32> to vector<8x128xf32>
    %c24 = arith.constant 24 : index
    %c0_14 = arith.constant 0 : index
    %18 = vector.load %arg12[%c24, %c0_14] : memref<72x128xf32, #tpu.memory_space<vmem>>, vector<8x128xf32>
    tpu.vector_store %arg12[%c24, %c0_14], %17 {strides = array<i32>} : memref<72x128xf32, #tpu.memory_space<vmem>>, vector<8x128xf32>,
    %19 = vector.extract_strided_slice %10 {offsets = [0, 512], sizes = [8, 128], strides = [1, 1]} : vector<8x1152xf32> to vector<8x128xf32>
    %c32 = arith.constant 32 : index
    %c0_15 = arith.constant 0 : index
    %20 = vector.load %arg12[%c32, %c0_15] : memref<72x128xf32, #tpu.memory_space<vmem>>, vector<8x128xf32>
    tpu.vector_store %arg12[%c32, %c0_15], %19 {strides = array<i32>} : memref<72x128xf32, #tpu.memory_space<vmem>>, vector<8x128xf32>,
    %21 = vector.extract_strided_slice %10 {offsets = [0, 640], sizes = [8, 128], strides = [1, 1]} : vector<8x1152xf32> to vector<8x128xf32>
    %c40 = arith.constant 40 : index
    %c0_16 = arith.constant 0 : index
    %22 = vector.load %arg12[%c40, %c0_16] : memref<72x128xf32, #tpu.memory_space<vmem>>, vector<8x128xf32>
    tpu.vector_store %arg12[%c40, %c0_16], %21 {strides = array<i32>} : memref<72x128xf32, #tpu.memory_space<vmem>>, vector<8x128xf32>,
    %23 = vector.extract_strided_slice %10 {offsets = [0, 768], sizes = [8, 128], strides = [1, 1]} : vector<8x1152xf32> to vector<8x128xf32>
    %c48 = arith.constant 48 : index
    %c0_17 = arith.constant 0 : index
    %24 = vector.load %arg12[%c48, %c0_17] : memref<72x128xf32, #tpu.memory_space<vmem>>, vector<8x128xf32>
    tpu.vector_store %arg12[%c48, %c0_17], %23 {strides = array<i32>} : memref<72x128xf32, #tpu.memory_space<vmem>>, vector<8x128xf32>,
    %25 = vector.extract_strided_slice %10 {offsets = [0, 896], sizes = [8, 128], strides = [1, 1]} : vector<8x1152xf32> to vector<8x128xf32>
    %c56 = arith.constant 56 : index
    %c0_18 = arith.constant 0 : index
    %26 = vector.load %arg12[%c56, %c0_18] : memref<72x128xf32, #tpu.memory_space<vmem>>, vector<8x128xf32>
    tpu.vector_store %arg12[%c56, %c0_18], %25 {strides = array<i32>} : memref<72x128xf32, #tpu.memory_space<vmem>>, vector<8x128xf32>,
    %27 = vector.extract_strided_slice %10 {offsets = [0, 1024], sizes = [8, 128], strides = [1, 1]} : vector<8x1152xf32> to vector<8x128xf32>
    %c64 = arith.constant 64 : index
    %c0_19 = arith.constant 0 : index
    %28 = vector.load %arg12[%c64, %c0_19] : memref<72x128xf32, #tpu.memory_space<vmem>>, vector<8x128xf32>
    tpu.vector_store %arg12[%c64, %c0_19], %27 {strides = array<i32>} : memref<72x128xf32, #tpu.memory_space<vmem>>, vector<8x128xf32>,
    %c0_20 = arith.constant 0 : index
    %c0_21 = arith.constant 0 : index
    %29 = vector.load %arg5[%c0_20, %c0_21] : memref<8x72xf32, #tpu.memory_space<vmem>>, vector<8x72xf32>
    %c0_22 = arith.constant 0 : index
    %c0_23 = arith.constant 0 : index
    %30 = vector.load %arg12[%c0_22, %c0_23] : memref<72x128xf32, #tpu.memory_space<vmem>>, vector<72x128xf32>
    %cst_24 = arith.constant dense<0.000000e+00> : vector<8x128xf32>
    %31 = tpu.matmul %29, %30, %cst_24 {dimension_numbers = #tpu.dot_dimension_numbers<[1], [0], [0], [1], [0, 0, 1, 1], [], []>} : vector<8x72xf32>, vector<72x128xf32>, vector<8x128xf32> -> vector<8x128xf32>
    %c0_25 = arith.constant 0 : index
    %c0_26 = arith.constant 0 : index
    %32 = vector.load %arg6[%c0_25, %c0_26] : memref<8x1xf32, #tpu.memory_space<vmem>>, vector<8x1xf32>
    %33 = vector.broadcast %32 : vector<8x1xf32> to vector<8x128xf32>
    %34 = arith.addf %31, %33 : vector<8x128xf32>
    %cst_27 = arith.constant 0.000000e+00 : f32
    %35 = vector.broadcast %cst_27 : f32 to vector<8x128xf32>
    %36 = arith.maximumf %34, %35 : vector<8x128xf32>
    %c0_28 = arith.constant 0 : index
    %c0_29 = arith.constant 0 : index
    %37 = vector.load %arg7[%c0_28, %c0_29] : memref<32x8xf32, #tpu.memory_space<vmem>>, vector<32x8xf32>
    %cst_30 = arith.constant dense<0.000000e+00> : vector<32x128xf32>
    %38 = tpu.matmul %37, %36, %cst_30 {dimension_numbers = #tpu.dot_dimension_numbers<[1], [0], [0], [1], [0, 0, 1, 1], [], []>} : vector<32x8xf32>, vector<8x128xf32>, vector<32x128xf32> -> vector<32x128xf32>
    %c0_31 = arith.constant 0 : index
    %c0_32 = arith.constant 0 : index
    %39 = vector.load %arg8[%c0_31, %c0_32] : memref<32x1xf32, #tpu.memory_space<vmem>>, vector<32x1xf32>
    %40 = vector.broadcast %39 : vector<32x1xf32> to vector<32x128xf32>
    %41 = arith.addf %38, %40 : vector<32x128xf32>
    %c0_33 = arith.constant 0 : index
    %c512 = arith.constant 512 : index
    %42 = vector.load %arg2[%c0_33, %c512] : memref<512x1152xf32, #tpu.memory_space<vmem>>, vector<512x128xf32>
    %cst_34 = arith.constant dense<0.000000e+00> : vector<16x128xf32>
    %43 = tpu.matmul %1, %42, %cst_34 {dimension_numbers = #tpu.dot_dimension_numbers<[1], [0], [0], [1], [0, 0, 1, 1], [], []>} : vector<16x512xf32>, vector<512x128xf32>, vector<16x128xf32> -> vector<16x128xf32>
    %c0_35 = arith.constant 0 : index
    %c0_36 = arith.constant 0 : index
    %44 = vector.load %arg9[%c0_35, %c0_36] : memref<32x16xf32, #tpu.memory_space<vmem>>, vector<32x16xf32>
    %cst_37 = arith.constant dense<0.000000e+00> : vector<32x128xf32>
    %45 = tpu.matmul %44, %43, %cst_37 {dimension_numbers = #tpu.dot_dimension_numbers<[1], [0], [0], [1], [0, 0, 1, 1], [], []>} : vector<32x16xf32>, vector<16x128xf32>, vector<32x128xf32> -> vector<32x128xf32>
    %c0_38 = arith.constant 0 : index
    %c0_39 = arith.constant 0 : index
    %46 = vector.load %arg10[%c0_38, %c0_39] : memref<32x1xf32, #tpu.memory_space<vmem>>, vector<32x1xf32>
    %47 = vector.broadcast %46 : vector<32x1xf32> to vector<32x128xf32>
    %48 = arith.addf %45, %47 : vector<32x128xf32>
    %49 = arith.addf %41, %48 : vector<32x128xf32>
    %cst_40 = arith.constant 0.000000e+00 : f32
    %50 = vector.broadcast %cst_40 : f32 to vector<32x128xf32>
    %51 = arith.maximumf %49, %50 : vector<32x128xf32>
    %c0_41 = arith.constant 0 : index
    %c0_42 = arith.constant 0 : index
    %c0_43 = arith.constant 0 : index
    %52 = vector.load %arg11[%c0_41, %c0_42, %c0_43] : memref<1x32x128xf32, #tpu.memory_space<vmem>>, vector<1x32x128xf32>
    %53 = vector.shape_cast %52 : vector<1x32x128xf32> to vector<32x128xf32>
    %54 = vector.shape_cast %51 : vector<32x128xf32> to vector<1x32x128xf32>
    tpu.vector_store %arg11[%c0_41, %c0_42, %c0_43], %54 {strides = array<i32>} : memref<1x32x128xf32, #tpu.memory_space<vmem>>, vector<1x32x128xf32>,
    return
  }
  func.func @transform_0(%arg0: i32) -> (i32, i32, i32) {
    %c0_i32 = arith.constant 0 : i32
    %c0_i32_0 = arith.constant 0 : i32
    %c0_i32_1 = arith.constant 0 : i32
    return %arg0, %c0_i32, %c0_i32_0 : i32, i32, i32
  }
  func.func @transform_1(%arg0: i32) -> (i32, i32) {
    %c0_i32 = arith.constant 0 : i32
    %c0_i32_0 = arith.constant 0 : i32
    %c0_i32_1 = arith.constant 0 : i32
    return %c0_i32, %c0_i32_0 : i32, i32
  }
  func.func @transform_2(%arg0: i32) -> (i32, i32) {
    %c0_i32 = arith.constant 0 : i32
    %c0_i32_0 = arith.constant 0 : i32
    %c0_i32_1 = arith.constant 0 : i32
    return %c0_i32, %c0_i32_0 : i32, i32
  }
  func.func @transform_3(%arg0: i32) -> (i32, i32) {
    %c0_i32 = arith.constant 0 : i32
    %c0_i32_0 = arith.constant 0 : i32
    %c0_i32_1 = arith.constant 0 : i32
    return %c0_i32, %c0_i32_0 : i32, i32
  }
  func.func @transform_4(%arg0: i32) -> (i32, i32) {
    %c0_i32 = arith.constant 0 : i32
    %c0_i32_0 = arith.constant 0 : i32
    %c0_i32_1 = arith.constant 0 : i32
    return %c0_i32, %c0_i32_0 : i32, i32
  }
  func.func @transform_5(%arg0: i32) -> (i32, i32) {
    %c0_i32 = arith.constant 0 : i32
    %c0_i32_0 = arith.constant 0 : i32
    %c0_i32_1 = arith.constant 0 : i32
    return %c0_i32, %c0_i32_0 : i32, i32
  }
  func.func @transform_6(%arg0: i32) -> (i32, i32) {
    %c0_i32 = arith.constant 0 : i32
    %c0_i32_0 = arith.constant 0 : i32
    %c0_i32_1 = arith.constant 0 : i32
    return %c0_i32, %c0_i32_0 : i32, i32
  }
  func.func @transform_7(%arg0: i32) -> (i32, i32) {
    %c0_i32 = arith.constant 0 : i32
    %c0_i32_0 = arith.constant 0 : i32
    %c0_i32_1 = arith.constant 0 : i32
    return %c0_i32, %c0_i32_0 : i32, i32
  }
  func.func @transform_8(%arg0: i32) -> (i32, i32) {
    %c0_i32 = arith.constant 0 : i32
    %c0_i32_0 = arith.constant 0 : i32
    %c0_i32_1 = arith.constant 0 : i32
    return %c0_i32, %c0_i32_0 : i32, i32
  }
  func.func @transform_9(%arg0: i32) -> (i32, i32) {
    %c0_i32 = arith.constant 0 : i32
    %c0_i32_0 = arith.constant 0 : i32
    %c0_i32_1 = arith.constant 0 : i32
    return %c0_i32, %c0_i32_0 : i32, i32
  }
  func.func @transform_10(%arg0: i32) -> (i32, i32, i32) {
    %c0_i32 = arith.constant 0 : i32
    %c0_i32_0 = arith.constant 0 : i32
    %c0_i32_1 = arith.constant 0 : i32
    return %arg0, %c0_i32, %c0_i32_0 : i32, i32, i32
  }
}

</mosaic_0001>

<llo_original>
// kernel: bottleneck_forward.1
$region0: #{bottleneck_forward.1}
  #allocation0 [shape = 'u32[]', space=smem, size = 0x4, offset = 0x4, fixed_abs, tag = 'smem constant byte address 0x4 - core index']
  #allocation1 [shape = 'u32[144,128]{1,0:T(1,128)}', space=vmem, size = 0x12000, scoped, tag = 'internal scratch']
  #allocation2 [shape = 'f32[72,128]{1,0:T(8,128)}', space=vmem, size = 0x9000, scoped, tag = 'scratch operand']
  %s0 = inlined_call_operand.vmem [shape: f32[1,16,512], index: 0, kind: input, shape index: {}]
  %s1 = inlined_call_operand.hbm [shape: f32[512,1152], index: 1, kind: input, shape index: {}]
  %s2 = inlined_call_operand.vmem [shape: f32[8,16], index: 2, kind: input, shape index: {}]
  %s3 = inlined_call_operand.vmem [shape: f32[8,1], index: 3, kind: input, shape index: {}]
  %s4 = inlined_call_operand.vmem [shape: f32[8,72], index: 4, kind: input, shape index: {}]
  %s5 = inlined_call_operand.vmem [shape: f32[8,1], index: 5, kind: input, shape index: {}]
  %s6 = inlined_call_operand.vmem [shape: f32[32,8], index: 6, kind: input, shape index: {}]
  %s7 = inlined_call_operand.vmem [shape: f32[32,1], index: 7, kind: input, shape index: {}]
  %s8 = inlined_call_operand.vmem [shape: f32[32,16], index: 8, kind: input, shape index: {}]
  %s9 = inlined_call_operand.vmem [shape: f32[32,1], index: 9, kind: input, shape index: {}]
  %s10 = inlined_call_operand.vmem [shape: f32[1,32,128], index: 10, kind: output, shape index: {}]
  %s11 = sld [smem:[#allocation0]]
  $region54: #{bottleneck_forward.1} parent=0
    _
  %s13 = ssub.s32 1, %s11
  %s14 = scalar_select 0, %s13, %s11
  $region1: #{bottleneck_forward.1} parent=0
    #allocation3 [shape = 'u8[2359296]{0}', space=vmem, size = 0x240000, scoped, tag = 'input window, operand 1, single buffered']
    #allocation4 [shape = 's32[1]{0}', space=sflag, size = 0x4, scoped, tag = 'scoped memory for bottleneck_forward.1']
    %15 = vsyncpa [#allocation4], 0
    // Predicated region
    $region2: #{bottleneck_forward.1} parent=1 // pred_check
      _
    $region3: #{bottleneck_forward.1} parent=1 // pred_check_branch
      %17 = sbr.rel (0) target = $region5
    $region4: #{bottleneck_forward.1} parent=1 // pred_region
      _
    $region5: #{bottleneck_forward.1} parent=1 // pred_fallthru
      _
    // Predicated region
    $region6: #{bottleneck_forward.1} parent=1 // pred_check
      _
    $region7: #{bottleneck_forward.1} parent=1 // pred_check_branch
      %19 = sbr.rel (0) target = $region9
    $region8: #{bottleneck_forward.1} parent=1 // pred_region
      %s21 = ssub.s32 73728, 73728
      %22 = vsyncadd [#allocation4], %s21
      %s23 = sshll.u32 [#allocation3], 4
      %s24 = int_to_ptr.vmem [resolvable:$true] %s23
      %29 = dma.hbm_to_vmem [thread:$0]  %s1, 73728, %s24, [#allocation4], 1152, 1152, 72
    $region9: #{bottleneck_forward.1} parent=1 // pred_fallthru
      _
    // Predicated region
    $region10: #{bottleneck_forward.1} parent=1 // pred_check
      _
    $region11: #{bottleneck_forward.1} parent=1 // pred_check_branch
      %31 = sbr.rel (0) target = $region13
    $region12: #{bottleneck_forward.1} parent=1 // pred_region
      _
    $region13: #{bottleneck_forward.1} parent=1 // pred_fallthru
      _
    // Predicated region
    $region14: #{bottleneck_forward.1} parent=1 // pred_check
      _
    $region15: #{bottleneck_forward.1} parent=1 // pred_check_branch
      %33 = sbr.rel (0) target = $region17
    $region16: #{bottleneck_forward.1} parent=1 // pred_region
      _
    $region17: #{bottleneck_forward.1} parent=1 // pred_fallthru
      _
    // Predicated region
    $region18: #{bottleneck_forward.1} parent=1 // pred_check
      _
    $region19: #{bottleneck_forward.1} parent=1 // pred_check_branch
      %35 = sbr.rel (0) target = $region21
    $region20: #{bottleneck_forward.1} parent=1 // pred_region
      _
    $region21: #{bottleneck_forward.1} parent=1 // pred_fallthru
      _
    // Predicated region
    $region22: #{bottleneck_forward.1} parent=1 // pred_check
      _
    $region23: #{bottleneck_forward.1} parent=1 // pred_check_branch
      %37 = sbr.rel (0) target = $region25
    $region24: #{bottleneck_forward.1} parent=1 // pred_region
      _
    $region25: #{bottleneck_forward.1} parent=1 // pred_fallthru
      _
    // Predicated region
    $region26: #{bottleneck_forward.1} parent=1 // pred_check
      _
    $region27: #{bottleneck_forward.1} parent=1 // pred_check_branch
      %39 = sbr.rel (0) target = $region29
    $region28: #{bottleneck_forward.1} parent=1 // pred_region
      _
    $region29: #{bottleneck_forward.1} parent=1 // pred_fallthru
      _
    // Predicated region
    $region30: #{bottleneck_forward.1} parent=1 // pred_check
      _
    $region31: #{bottleneck_forward.1} parent=1 // pred_check_branch
      %41 = sbr.rel (0) target = $region33
    $region32: #{bottleneck_forward.1} parent=1 // pred_region
      _
    $region33: #{bottleneck_forward.1} parent=1 // pred_fallthru
      _
    // Predicated region
    $region34: #{bottleneck_forward.1} parent=1 // pred_check
      _
    $region35: #{bottleneck_forward.1} parent=1 // pred_check_branch
      %43 = sbr.rel (0) target = $region37
    $region36: #{bottleneck_forward.1} parent=1 // pred_region
      _
    $region37: #{bottleneck_forward.1} parent=1 // pred_fallthru
      _
    // Predicated region
    $region38: #{bottleneck_forward.1} parent=1 // pred_check
      _
    $region39: #{bottleneck_forward.1} parent=1 // pred_check_branch
      %45 = sbr.rel (0) target = $region41
    $region40: #{bottleneck_forward.1} parent=1 // pred_region
      _
    $region41: #{bottleneck_forward.1} parent=1 // pred_fallthru
      _
    // Predicated region
    $region42: #{bottleneck_forward.1} parent=1 // pred_check
      _
    $region43: #{bottleneck_forward.1} parent=1 // pred_check_branch
      %47 = sbr.rel (0) target = $region45
    $region44: #{bottleneck_forward.1} parent=1 // pred_region
      %48 = dma.done [#allocation4], 73728
    $region45: #{bottleneck_forward.1} parent=1 // pred_fallthru
      _
    %v49 = vld [vmem:[%s0] sm:$0xff]
    %v50 = vld [vmem:[%s0 + $0x8] sm:$0xff]
    %v51 = vld [vmem:[%s0 + $0x10] sm:$0xff]
    %v52 = vld [vmem:[%s0 + $0x18] sm:$0xff]
    %v53 = vld [vmem:[%s0 + $0x20] sm:$0xff]
    %v54 = vld [vmem:[%s0 + $0x28] sm:$0xff]
    %v55 = vld [vmem:[%s0 + $0x30] sm:$0xff]
    %v56 = vld [vmem:[%s0 + $0x38] sm:$0xff]
    %v57 = vld [vmem:[%s2] sm:$0xff]
    %v58 = vld [vmem:[%s3] sm:$0xff]
    %60 = vset.pattern.permute.xlu0 0
    %61 = vperm.xlu0 %60, %v58
    %v62 = vpop.permute.xlu0 %61
    %vm64 = vcmask 130048
    %v66 = vsel %vm64, %v57, 0
    %68 = vmatprep.subr.mxu0 %v50
    %69 = vmatpush1.msra.mxu0 %v49
    %70 = vmatprep.subr.mxu0 %v54
    %71 = vmatpush1.msra.mxu0 %v53
    %72 = vmatprep.subr.mxu0 0.0
    %73 = vmatpush1.msra.mxu0 0.0
    %74 = vmatprep.subr.mxu0 0.0
    %75 = vmatpush1.msra.mxu0 0.0
    %76 = vmatprep.subr.mxu0 0.0
    %77 = vmatpush1.msra.mxu0 0.0
    %78 = vmatprep.subr.mxu0 0.0
    %79 = vmatpush1.msra.mxu0 0.0
    %80 = vmatprep.subr.mxu0 0.0
    %81 = vmatpush1.msra.mxu0 0.0
    %82 = vmatprep.subr.mxu0 0.0
    %83 = vmatpush1.msra.mxu0 0.0
    %84 = vmatprep.subr.mxu0 0.0
    %85 = vmatpush1.msra.mxu0 0.0
    %86 = vmatprep.subr.mxu0 0.0
    %87 = vmatpush1.msra.mxu0 0.0
    %88 = vmatprep.subr.mxu0 0.0
    %89 = vmatpush1.msra.mxu0 0.0
    %90 = vmatprep.subr.mxu0 0.0
    %91 = vmatpush1.msra.mxu0 0.0
    %92 = vmatprep.subr.mxu0 0.0
    %93 = vmatpush1.msra.mxu0 0.0
    %94 = vmatprep.subr.mxu0 0.0
    %95 = vmatpush1.msra.mxu0 0.0
    %96 = vmatprep.subr.mxu0 0.0
    %97 = vmatpush1.msra.mxu0 0.0
    %98 = vmatprep.subr.mxu0 0.0
    %99 = vmatpush1.msra.mxu0 0.0
    %100 = vmatprep.subr.mxu0 0.0
    %101 = vmatpush1.msra.mxu0 0.0
    %102 = vmatprep.subr.mxu0 0.0
    %103 = vmatpush1.msra.mxu0 0.0
    %104 = vmatprep.subr.mxu0 0.0
    %105 = vmatpush1.msra.mxu0 0.0
    %106 = vmatprep.subr.mxu0 0.0
    %107 = vmatpush1.msra.mxu0 0.0
    %108 = vmatprep.subr.mxu0 0.0
    %109 = vmatpush1.msra.mxu0 0.0
    %110 = vmatprep.subr.mxu0 0.0
    %111 = vmatpush1.msra.mxu0 0.0
    %112 = vmatprep.subr.mxu0 0.0
    %113 = vmatpush1.msra.mxu0 0.0
    %114 = vmatprep.subr.mxu0 0.0
    %115 = vmatpush1.msra.mxu0 0.0
    %116 = vmatprep.subr.mxu0 0.0
    %117 = vmatpush1.msra.mxu0 0.0
    %118 = vmatprep.subr.mxu0 0.0
    %119 = vmatpush1.msra.mxu0 0.0
    %120 = vmatprep.subr.mxu0 0.0
    %121 = vmatpush1.msra.mxu0 0.0
    %122 = vmatprep.subr.mxu0 0.0
    %123 = vmatpush1.msra.mxu0 0.0
    %124 = vmatprep.subr.mxu0 0.0
    %125 = vmatpush1.msra.mxu0 0.0
    %126 = vmatprep.subr.mxu0 0.0
    %127 = vmatpush1.msra.mxu0 0.0
    %128 = vmatprep.subr.mxu0 0.0
    %129 = vmatpush1.msra.mxu0 0.0
    %130 = vmatprep.subr.mxu0 0.0
    %131 = vmatpush1.msra.mxu0 0.0
    %132 = vmatprep.mubr.f32.mxu0 0.0
    %133 = vmatmul.mubr.f32.gmra.mrb[0].mxu0 %v66
    %v134 = vpop.f32.mrb[0].mxu0
    %v135 = vadd.f32 %v62, %v134
    %v136 = vpop.f32.mrb[0].mxu0
    %v137 = vadd.f32 %v62, %v136
    %138 = vdwg.mxu0
    %139 = vmatprep.subr.mxu0 %v52
    %140 = vmatpush1.msra.mxu0 %v51
    %141 = vmatprep.subr.mxu0 %v56
    %142 = vmatpush1.msra.mxu0 %v55
    %143 = vmatprep.subr.mxu0 0.0
    %144 = vmatpush1.msra.mxu0 0.0
    %145 = vmatprep.subr.mxu0 0.0
    %146 = vmatpush1.msra.mxu0 0.0
    %147 = vmatprep.subr.mxu0 0.0
    %148 = vmatpush1.msra.mxu0 0.0
    %149 = vmatprep.subr.mxu0 0.0
    %150 = vmatpush1.msra.mxu0 0.0
    %151 = vmatprep.subr.mxu0 0.0
    %152 = vmatpush1.msra.mxu0 0.0
    %153 = vmatprep.subr.mxu0 0.0
    %154 = vmatpush1.msra.mxu0 0.0
    %155 = vmatprep.subr.mxu0 0.0
    %156 = vmatpush1.msra.mxu0 0.0
    %157 = vmatprep.subr.mxu0 0.0
    %158 = vmatpush1.msra.mxu0 0.0
    %159 = vmatprep.subr.mxu0 0.0
    %160 = vmatpush1.msra.mxu0 0.0
    %161 = vmatprep.subr.mxu0 0.0
    %162 = vmatpush1.msra.mxu0 0.0
    %163 = vmatprep.subr.mxu0 0.0
    %164 = vmatpush1.msra.mxu0 0.0
    %165 = vmatprep.subr.mxu0 0.0
    %166 = vmatpush1.msra.mxu0 0.0
    %167 = vmatprep.subr.mxu0 0.0
    %168 = vmatpush1.msra.mxu0 0.0
    %169 = vmatprep.subr.mxu0 0.0
    %170 = vmatpush1.msra.mxu0 0.0
    %171 = vmatprep.subr.mxu0 0.0
    %172 = vmatpush1.msra.mxu0 0.0
    %173 = vmatprep.subr.mxu0 0.0
    %174 = vmatpush1.msra.mxu0 0.0
    %175 = vmatprep.subr.mxu0 0.0
    %176 = vmatpush1.msra.mxu0 0.0
    %177 = vmatprep.subr.mxu0 0.0
    %178 = vmatpush1.msra.mxu0 0.0
    %179 = vmatprep.subr.mxu0 0.0
    %180 = vmatpush1.msra.mxu0 0.0
    %181 = vmatprep.subr.mxu0 0.0
    %182 = vmatpush1.msra.mxu0 0.0
    %183 = vmatprep.subr.mxu0 0.0
    %184 = vmatpush1.msra.mxu0 0.0
    %185 = vmatprep.subr.mxu0 0.0
    %186 = vmatpush1.msra.mxu0 0.0
    %187 = vmatprep.subr.mxu0 0.0
    %188 = vmatpush1.msra.mxu0 0.0
    %189 = vmatprep.subr.mxu0 0.0
    %190 = vmatpush1.msra.mxu0 0.0
    %191 = vmatprep.subr.mxu0 0.0
    %192 = vmatpush1.msra.mxu0 0.0
    %193 = vmatprep.subr.mxu0 0.0
    %194 = vmatpush1.msra.mxu0 0.0
    %195 = vmatprep.subr.mxu0 0.0
    %196 = vmatpush1.msra.mxu0 0.0
    %197 = vmatprep.subr.mxu0 0.0
    %198 = vmatpush1.msra.mxu0 0.0
    %199 = vmatprep.subr.mxu0 0.0
    %200 = vmatpush1.msra.mxu0 0.0
    %201 = vmatprep.subr.mxu0 0.0
    %202 = vmatpush1.msra.mxu0 0.0
    %203 = vmatprep.mubr.f32.mxu0 0.0
    %204 = vmatmul.mubr.f32.gmra.mrb[0].mxu0 %v66
    %v205 = vpop.f32.mrb[0].mxu0
    %v206 = vadd.f32 %v62, %v205
    %v207 = vpop.f32.mrb[0].mxu0
    %v208 = vadd.f32 %v62, %v207
    %209 = vdwg.mxu0
    %v210 = vmax.f32 %v135, 0.0
    %v211 = vmax.f32 %v137, 0.0
    %v212 = vmax.f32 %v206, 0.0
    %v213 = vmax.f32 %v208, 0.0
    %v214 = vld [vmem:[#allocation3] sm:$0xff]
    %v215 = vld [vmem:[#allocation3 + $0x8] sm:$0xff]
    %v216 = vld [vmem:[#allocation3 + $0x10] sm:$0xff]
    %v217 = vld [vmem:[#allocation3 + $0x18] sm:$0xff]
    %v218 = vld [vmem:[#allocation3 + $0x20] sm:$0xff]
    %v219 = vld [vmem:[#allocation3 + $0x28] sm:$0xff]
    %v220 = vld [vmem:[#allocation3 + $0x30] sm:$0xff]
    %v221 = vld [vmem:[#allocation3 + $0x38] sm:$0xff]
    %v222 = vld [vmem:[#allocation3 + $0x40] sm:$0xff]
    %v223 = vld [vmem:[#allocation3 + $0x48] sm:$0xff]
    %v224 = vld [vmem:[#allocation3 + $0x50] sm:$0xff]
    %v225 = vld [vmem:[#allocation3 + $0x58] sm:$0xff]
    %v226 = vld [vmem:[#allocation3 + $0x60] sm:$0xff]
    %v227 = vld [vmem:[#allocation3 + $0x68] sm:$0xff]
    %v228 = vld [vmem:[#allocation3 + $0x70] sm:$0xff]
    %v229 = vld [vmem:[#allocation3 + $0x78] sm:$0xff]
    %v230 = vld [vmem:[#allocation3 + $0x80] sm:$0xff]
    %v231 = vld [vmem:[#allocation3 + $0x88] sm:$0xff]
    %v232 = vld [vmem:[#allocation3 + $0x90] sm:$0xff]
    %v233 = vld [vmem:[#allocation3 + $0x98] sm:$0xff]
    %v234 = vld [vmem:[#allocation3 + $0xa0] sm:$0xff]
    %v235 = vld [vmem:[#allocation3 + $0xa8] sm:$0xff]
    %v236 = vld [vmem:[#allocation3 + $0xb0] sm:$0xff]
    %v237 = vld [vmem:[#allocation3 + $0xb8] sm:$0xff]
    %v238 = vld [vmem:[#allocation3 + $0xc0] sm:$0xff]
    %v239 = vld [vmem:[#allocation3 + $0xc8] sm:$0xff]
    %v240 = vld [vmem:[#allocation3 + $0xd0] sm:$0xff]
    %v241 = vld [vmem:[#allocation3 + $0xd8] sm:$0xff]
    %v242 = vld [vmem:[#allocation3 + $0xe0] sm:$0xff]
    %v243 = vld [vmem:[#allocation3 + $0xe8] sm:$0xff]
    %v244 = vld [vmem:[#allocation3 + $0xf0] sm:$0xff]
    %v245 = vld [vmem:[#allocation3 + $0xf8] sm:$0xff]
    %v246 = vld [vmem:[#allocation3 + $0x100] sm:$0xff]
    %v247 = vld [vmem:[#allocation3 + $0x108] sm:$0xff]
    %v248 = vld [vmem:[#allocation3 + $0x110] sm:$0xff]
    %v249 = vld [vmem:[#allocation3 + $0x118] sm:$0xff]
    %v250 = vld [vmem:[#allocation3 + $0x120] sm:$0xff]
    %v251 = vld [vmem:[#allocation3 + $0x128] sm:$0xff]
    %v252 = vld [vmem:[#allocation3 + $0x130] sm:$0xff]
    %v253 = vld [vmem:[#allocation3 + $0x138] sm:$0xff]
    %v254 = vld [vmem:[#allocation3 + $0x140] sm:$0xff]
    %v255 = vld [vmem:[#allocation3 + $0x148] sm:$0xff]
    %v256 = vld [vmem:[#allocation3 + $0x150] sm:$0xff]
    %v257 = vld [vmem:[#allocation3 + $0x158] sm:$0xff]
    %v258 = vld [vmem:[#allocation3 + $0x160] sm:$0xff]
    %v259 = vld [vmem:[#allocation3 + $0x168] sm:$0xff]
    %v260 = vld [vmem:[#allocation3 + $0x170] sm:$0xff]
    %v261 = vld [vmem:[#allocation3 + $0x178] sm:$0xff]
    %v262 = vld [vmem:[#allocation3 + $0x180] sm:$0xff]
    %v263 = vld [vmem:[#allocation3 + $0x188] sm:$0xff]
    %v264 = vld [vmem:[#allocation3 + $0x190] sm:$0xff]
    %v265 = vld [vmem:[#allocation3 + $0x198] sm:$0xff]
    %v266 = vld [vmem:[#allocation3 + $0x1a0] sm:$0xff]
    %v267 = vld [vmem:[#allocation3 + $0x1a8] sm:$0xff]
    %v268 = vld [vmem:[#allocation3 + $0x1b0] sm:$0xff]
    %v269 = vld [vmem:[#allocation3 + $0x1b8] sm:$0xff]
    %v270 = vld [vmem:[#allocation3 + $0x1c0] sm:$0xff]
    %v271 = vld [vmem:[#allocation3 + $0x1c8] sm:$0xff]
    %v272 = vld [vmem:[#allocation3 + $0x1d0] sm:$0xff]
    %v273 = vld [vmem:[#allocation3 + $0x1d8] sm:$0xff]
    %v274 = vld [vmem:[#allocation3 + $0x1e0] sm:$0xff]
    %v275 = vld [vmem:[#allocation3 + $0x1e8] sm:$0xff]
    %v276 = vld [vmem:[#allocation3 + $0x1f0] sm:$0xff]
    %v277 = vld [vmem:[#allocation3 + $0x1f8] sm:$0xff]
    %v278 = vld [vmem:[#allocation3 + $0x200] sm:$0xff]
    %v279 = vld [vmem:[#allocation3 + $0x208] sm:$0xff]
    %v280 = vld [vmem:[#allocation3 + $0x210] sm:$0xff]
    %v281 = vld [vmem:[#allocation3 + $0x218] sm:$0xff]
    %v282 = vld [vmem:[#allocation3 + $0x220] sm:$0xff]
    %v283 = vld [vmem:[#allocation3 + $0x228] sm:$0xff]
    %v284 = vld [vmem:[#allocation3 + $0x230] sm:$0xff]
    %v285 = vld [vmem:[#allocation3 + $0x238] sm:$0xff]
    %v286 = vld [vmem:[#allocation3 + $0x240] sm:$0xff]
    %v287 = vld [vmem:[#allocation3 + $0x248] sm:$0xff]
    %v288 = vld [vmem:[#allocation3 + $0x250] sm:$0xff]
    %v289 = vld [vmem:[#allocation3 + $0x258] sm:$0xff]
    %v290 = vld [vmem:[#allocation3 + $0x260] sm:$0xff]
    %v291 = vld [vmem:[#allocation3 + $0x268] sm:$0xff]
    %v292 = vld [vmem:[#allocation3 + $0x270] sm:$0xff]
    %v293 = vld [vmem:[#allocation3 + $0x278] sm:$0xff]
    %v294 = vld [vmem:[#allocation3 + $0x280] sm:$0xff]
    %v295 = vld [vmem:[#allocation3 + $0x288] sm:$0xff]
    %v296 = vld [vmem:[#allocation3 + $0x290] sm:$0xff]
    %v297 = vld [vmem:[#allocation3 + $0x298] sm:$0xff]
    %v298 = vld [vmem:[#allocation3 + $0x2a0] sm:$0xff]
    %v299 = vld [vmem:[#allocation3 + $0x2a8] sm:$0xff]
    %v300 = vld [vmem:[#allocation3 + $0x2b0] sm:$0xff]
    %v301 = vld [vmem:[#allocation3 + $0x2b8] sm:$0xff]
    %v302 = vld [vmem:[#allocation3 + $0x2c0] sm:$0xff]
    %v303 = vld [vmem:[#allocation3 + $0x2c8] sm:$0xff]
    %v304 = vld [vmem:[#allocation3 + $0x2d0] sm:$0xff]
    %v305 = vld [vmem:[#allocation3 + $0x2d8] sm:$0xff]
    %v306 = vld [vmem:[#allocation3 + $0x2e0] sm:$0xff]
    %v307 = vld [vmem:[#allocation3 + $0x2e8] sm:$0xff]
    %v308 = vld [vmem:[#allocation3 + $0x2f0] sm:$0xff]
    %v309 = vld [vmem:[#allocation3 + $0x2f8] sm:$0xff]
    %v310 = vld [vmem:[#allocation3 + $0x300] sm:$0xff]
    %v311 = vld [vmem:[#allocation3 + $0x308] sm:$0xff]
    %v312 = vld [vmem:[#allocation3 + $0x310] sm:$0xff]
    %v313 = vld [vmem:[#allocation3 + $0x318] sm:$0xff]
    %v314 = vld [vmem:[#allocation3 + $0x320] sm:$0xff]
    %v315 = vld [vmem:[#allocation3 + $0x328] sm:$0xff]
    %v316 = vld [vmem:[#allocation3 + $0x330] sm:$0xff]
    %v317 = vld [vmem:[#allocation3 + $0x338] sm:$0xff]
    %v318 = vld [vmem:[#allocation3 + $0x340] sm:$0xff]
    %v319 = vld [vmem:[#allocation3 + $0x348] sm:$0xff]
    %v320 = vld [vmem:[#allocation3 + $0x350] sm:$0xff]
    %v321 = vld [vmem:[#allocation3 + $0x358] sm:$0xff]
    %v322 = vld [vmem:[#allocation3 + $0x360] sm:$0xff]
    %v323 = vld [vmem:[#allocation3 + $0x368] sm:$0xff]
    %v324 = vld [vmem:[#allocation3 + $0x370] sm:$0xff]
    %v325 = vld [vmem:[#allocation3 + $0x378] sm:$0xff]
    %v326 = vld [vmem:[#allocation3 + $0x380] sm:$0xff]
    %v327 = vld [vmem:[#allocation3 + $0x388] sm:$0xff]
    %v328 = vld [vmem:[#allocation3 + $0x390] sm:$0xff]
    %v329 = vld [vmem:[#allocation3 + $0x398] sm:$0xff]
    %v330 = vld [vmem:[#allocation3 + $0x3a0] sm:$0xff]
    %v331 = vld [vmem:[#allocation3 + $0x3a8] sm:$0xff]
    %v332 = vld [vmem:[#allocation3 + $0x3b0] sm:$0xff]
    %v333 = vld [vmem:[#allocation3 + $0x3b8] sm:$0xff]
    %v334 = vld [vmem:[#allocation3 + $0x3c0] sm:$0xff]
    %v335 = vld [vmem:[#allocation3 + $0x3c8] sm:$0xff]
    %v336 = vld [vmem:[#allocation3 + $0x3d0] sm:$0xff]
    %v337 = vld [vmem:[#allocation3 + $0x3d8] sm:$0xff]
    %v338 = vld [vmem:[#allocation3 + $0x3e0] sm:$0xff]
    %v339 = vld [vmem:[#allocation3 + $0x3e8] sm:$0xff]
    %v340 = vld [vmem:[#allocation3 + $0x3f0] sm:$0xff]
    %v341 = vld [vmem:[#allocation3 + $0x3f8] sm:$0xff]
    %v342 = vld [vmem:[#allocation3 + $0x400] sm:$0xff]
    %v343 = vld [vmem:[#allocation3 + $0x408] sm:$0xff]
    %v344 = vld [vmem:[#allocation3 + $0x410] sm:$0xff]
    %v345 = vld [vmem:[#allocation3 + $0x418] sm:$0xff]
    %v346 = vld [vmem:[#allocation3 + $0x420] sm:$0xff]
    %v347 = vld [vmem:[#allocation3 + $0x428] sm:$0xff]
    %v348 = vld [vmem:[#allocation3 + $0x430] sm:$0xff]
    %v349 = vld [vmem:[#allocation3 + $0x438] sm:$0xff]
    %v350 = vld [vmem:[#allocation3 + $0x440] sm:$0xff]
    %v351 = vld [vmem:[#allocation3 + $0x448] sm:$0xff]
    %v352 = vld [vmem:[#allocation3 + $0x450] sm:$0xff]
    %v353 = vld [vmem:[#allocation3 + $0x458] sm:$0xff]
    %v354 = vld [vmem:[#allocation3 + $0x460] sm:$0xff]
    %v355 = vld [vmem:[#allocation3 + $0x468] sm:$0xff]
    %v356 = vld [vmem:[#allocation3 + $0x470] sm:$0xff]
    %v357 = vld [vmem:[#allocation3 + $0x478] sm:$0xff]
    %v358 = vld [vmem:[#allocation3 + $0x480] sm:$0xff]
    %v359 = vld [vmem:[#allocation3 + $0x488] sm:$0xff]
    %v360 = vld [vmem:[#allocation3 + $0x490] sm:$0xff]
    %v361 = vld [vmem:[#allocation3 + $0x498] sm:$0xff]
    %v362 = vld [vmem:[#allocation3 + $0x4a0] sm:$0xff]
    %v363 = vld [vmem:[#allocation3 + $0x4a8] sm:$0xff]
    %v364 = vld [vmem:[#allocation3 + $0x4b0] sm:$0xff]
    %v365 = vld [vmem:[#allocation3 + $0x4b8] sm:$0xff]
    %v366 = vld [vmem:[#allocation3 + $0x4c0] sm:$0xff]
    %v367 = vld [vmem:[#allocation3 + $0x4c8] sm:$0xff]
    %v368 = vld [vmem:[#allocation3 + $0x4d0] sm:$0xff]
    %v369 = vld [vmem:[#allocation3 + $0x4d8] sm:$0xff]
    %v370 = vld [vmem:[#allocation3 + $0x4e0] sm:$0xff]
    %v371 = vld [vmem:[#allocation3 + $0x4e8] sm:$0xff]
    %v372 = vld [vmem:[#allocation3 + $0x4f0] sm:$0xff]
    %v373 = vld [vmem:[#allocation3 + $0x4f8] sm:$0xff]
    %v374 = vld [vmem:[#allocation3 + $0x500] sm:$0xff]
    %v375 = vld [vmem:[#allocation3 + $0x508] sm:$0xff]
    %v376 = vld [vmem:[#allocation3 + $0x510] sm:$0xff]
    %v377 = vld [vmem:[#allocation3 + $0x518] sm:$0xff]
    %v378 = vld [vmem:[#allocation3 + $0x520] sm:$0xff]
    %v379 = vld [vmem:[#allocation3 + $0x528] sm:$0xff]
    %v380 = vld [vmem:[#allocation3 + $0x530] sm:$0xff]
    %v381 = vld [vmem:[#allocation3 + $0x538] sm:$0xff]
    %v382 = vld [vmem:[#allocation3 + $0x540] sm:$0xff]
    %v383 = vld [vmem:[#allocation3 + $0x548] sm:$0xff]
    %v384 = vld [vmem:[#allocation3 + $0x550] sm:$0xff]
    %v385 = vld [vmem:[#allocation3 + $0x558] sm:$0xff]
    %v386 = vld [vmem:[#allocation3 + $0x560] sm:$0xff]
    %v387 = vld [vmem:[#allocation3 + $0x568] sm:$0xff]
    %v388 = vld [vmem:[#allocation3 + $0x570] sm:$0xff]
    %v389 = vld [vmem:[#allocation3 + $0x578] sm:$0xff]
    %v390 = vld [vmem:[#allocation3 + $0x580] sm:$0xff]
    %v391 = vld [vmem:[#allocation3 + $0x588] sm:$0xff]
    %v392 = vld [vmem:[#allocation3 + $0x590] sm:$0xff]
    %v393 = vld [vmem:[#allocation3 + $0x598] sm:$0xff]
    %v394 = vld [vmem:[#allocation3 + $0x5a0] sm:$0xff]
    %v395 = vld [vmem:[#allocation3 + $0x5a8] sm:$0xff]
    %v396 = vld [vmem:[#allocation3 + $0x5b0] sm:$0xff]
    %v397 = vld [vmem:[#allocation3 + $0x5b8] sm:$0xff]
    %v398 = vld [vmem:[#allocation3 + $0x5c0] sm:$0xff]
    %v399 = vld [vmem:[#allocation3 + $0x5c8] sm:$0xff]
    %v400 = vld [vmem:[#allocation3 + $0x5d0] sm:$0xff]
    %v401 = vld [vmem:[#allocation3 + $0x5d8] sm:$0xff]
    %v402 = vld [vmem:[#allocation3 + $0x5e0] sm:$0xff]
    %v403 = vld [vmem:[#allocation3 + $0x5e8] sm:$0xff]
    %v404 = vld [vmem:[#allocation3 + $0x5f0] sm:$0xff]
    %v405 = vld [vmem:[#allocation3 + $0x5f8] sm:$0xff]
    %v406 = vld [vmem:[#allocation3 + $0x600] sm:$0xff]
    %v407 = vld [vmem:[#allocation3 + $0x608] sm:$0xff]
    %v408 = vld [vmem:[#allocation3 + $0x610] sm:$0xff]
    %v409 = vld [vmem:[#allocation3 + $0x618] sm:$0xff]
    %v410 = vld [vmem:[#allocation3 + $0x620] sm:$0xff]
    %v411 = vld [vmem:[#allocation3 + $0x628] sm:$0xff]
    %v412 = vld [vmem:[#allocation3 + $0x630] sm:$0xff]
    %v413 = vld [vmem:[#allocation3 + $0x638] sm:$0xff]
    %v414 = vld [vmem:[#allocation3 + $0x640] sm:$0xff]
    %v415 = vld [vmem:[#allocation3 + $0x648] sm:$0xff]
    %v416 = vld [vmem:[#allocation3 + $0x650] sm:$0xff]
    %v417 = vld [vmem:[#allocation3 + $0x658] sm:$0xff]
    %v418 = vld [vmem:[#allocation3 + $0x660] sm:$0xff]
    %v419 = vld [vmem:[#allocation3 + $0x668] sm:$0xff]
    %v420 = vld [vmem:[#allocation3 + $0x670] sm:$0xff]
    %v421 = vld [vmem:[#allocation3 + $0x678] sm:$0xff]
    %v422 = vld [vmem:[#allocation3 + $0x680] sm:$0xff]
    %v423 = vld [vmem:[#allocation3 + $0x688] sm:$0xff]
    %v424 = vld [vmem:[#allocation3 + $0x690] sm:$0xff]
    %v425 = vld [vmem:[#allocation3 + $0x698] sm:$0xff]
    %v426 = vld [vmem:[#allocation3 + $0x6a0] sm:$0xff]
    %v427 = vld [vmem:[#allocation3 + $0x6a8] sm:$0xff]
    %v428 = vld [vmem:[#allocation3 + $0x6b0] sm:$0xff]
    %v429 = vld [vmem:[#allocation3 + $0x6b8] sm:$0xff]
    %v430 = vld [vmem:[#allocation3 + $0x6c0] sm:$0xff]
    %v431 = vld [vmem:[#allocation3 + $0x6c8] sm:$0xff]
    %v432 = vld [vmem:[#allocation3 + $0x6d0] sm:$0xff]
    %v433 = vld [vmem:[#allocation3 + $0x6d8] sm:$0xff]
    %v434 = vld [vmem:[#allocation3 + $0x6e0] sm:$0xff]
    %v435 = vld [vmem:[#allocation3 + $0x6e8] sm:$0xff]
    %v436 = vld [vmem:[#allocation3 + $0x6f0] sm:$0xff]
    %v437 = vld [vmem:[#allocation3 + $0x6f8] sm:$0xff]
    %v438 = vld [vmem:[#allocation3 + $0x700] sm:$0xff]
    %v439 = vld [vmem:[#allocation3 + $0x708] sm:$0xff]
    %v440 = vld [vmem:[#allocation3 + $0x710] sm:$0xff]
    %v441 = vld [vmem:[#allocation3 + $0x718] sm:$0xff]
    %v442 = vld [vmem:[#allocation3 + $0x720] sm:$0xff]
    %v443 = vld [vmem:[#allocation3 + $0x728] sm:$0xff]
    %v444 = vld [vmem:[#allocation3 + $0x730] sm:$0xff]
    %v445 = vld [vmem:[#allocation3 + $0x738] sm:$0xff]
    %v446 = vld [vmem:[#allocation3 + $0x740] sm:$0xff]
    %v447 = vld [vmem:[#allocation3 + $0x748] sm:$0xff]
    %v448 = vld [vmem:[#allocation3 + $0x750] sm:$0xff]
    %v449 = vld [vmem:[#allocation3 + $0x758] sm:$0xff]
    %v450 = vld [vmem:[#allocation3 + $0x760] sm:$0xff]
    %v451 = vld [vmem:[#allocation3 + $0x768] sm:$0xff]
    %v452 = vld [vmem:[#allocation3 + $0x770] sm:$0xff]
    %v453 = vld [vmem:[#allocation3 + $0x778] sm:$0xff]
    %v454 = vld [vmem:[#allocation3 + $0x780] sm:$0xff]
    %v455 = vld [vmem:[#allocation3 + $0x788] sm:$0xff]
    %v456 = vld [vmem:[#allocation3 + $0x790] sm:$0xff]
    %v457 = vld [vmem:[#allocation3 + $0x798] sm:$0xff]
    %v458 = vld [vmem:[#allocation3 + $0x7a0] sm:$0xff]
    %v459 = vld [vmem:[#allocation3 + $0x7a8] sm:$0xff]
    %v460 = vld [vmem:[#allocation3 + $0x7b0] sm:$0xff]
    %v461 = vld [vmem:[#allocation3 + $0x7b8] sm:$0xff]
    %v462 = vld [vmem:[#allocation3 + $0x7c0] sm:$0xff]
    %v463 = vld [vmem:[#allocation3 + $0x7c8] sm:$0xff]
    %v464 = vld [vmem:[#allocation3 + $0x7d0] sm:$0xff]
    %v465 = vld [vmem:[#allocation3 + $0x7d8] sm:$0xff]
    %v466 = vld [vmem:[#allocation3 + $0x7e0] sm:$0xff]
    %v467 = vld [vmem:[#allocation3 + $0x7e8] sm:$0xff]
    %v468 = vld [vmem:[#allocation3 + $0x7f0] sm:$0xff]
    %v469 = vld [vmem:[#allocation3 + $0x7f8] sm:$0xff]
    %v470 = vld [vmem:[#allocation3 + $0x800] sm:$0xff]
    %v471 = vld [vmem:[#allocation3 + $0x808] sm:$0xff]
    %v472 = vld [vmem:[#allocation3 + $0x810] sm:$0xff]
    %v473 = vld [vmem:[#allocation3 + $0x818] sm:$0xff]
    %v474 = vld [vmem:[#allocation3 + $0x820] sm:$0xff]
    %v475 = vld [vmem:[#allocation3 + $0x828] sm:$0xff]
    %v476 = vld [vmem:[#allocation3 + $0x830] sm:$0xff]
    %v477 = vld [vmem:[#allocation3 + $0x838] sm:$0xff]
    %v478 = vld [vmem:[#allocation3 + $0x840] sm:$0xff]
    %v479 = vld [vmem:[#allocation3 + $0x848] sm:$0xff]
    %v480 = vld [vmem:[#allocation3 + $0x850] sm:$0xff]
    %v481 = vld [vmem:[#allocation3 + $0x858] sm:$0xff]
    %v482 = vld [vmem:[#allocation3 + $0x860] sm:$0xff]
    %v483 = vld [vmem:[#allocation3 + $0x868] sm:$0xff]
    %v484 = vld [vmem:[#allocation3 + $0x870] sm:$0xff]
    %v485 = vld [vmem:[#allocation3 + $0x878] sm:$0xff]
    %v486 = vld [vmem:[#allocation3 + $0x880] sm:$0xff]
    %v487 = vld [vmem:[#allocation3 + $0x888] sm:$0xff]
    %v488 = vld [vmem:[#allocation3 + $0x890] sm:$0xff]
    %v489 = vld [vmem:[#allocation3 + $0x898] sm:$0xff]
    %v490 = vld [vmem:[#allocation3 + $0x8a0] sm:$0xff]
    %v491 = vld [vmem:[#allocation3 + $0x8a8] sm:$0xff]
    %v492 = vld [vmem:[#allocation3 + $0x8b0] sm:$0xff]
    %v493 = vld [vmem:[#allocation3 + $0x8b8] sm:$0xff]
    %v494 = vld [vmem:[#allocation3 + $0x8c0] sm:$0xff]
    %v495 = vld [vmem:[#allocation3 + $0x8c8] sm:$0xff]
    %v496 = vld [vmem:[#allocation3 + $0x8d0] sm:$0xff]
    %v497 = vld [vmem:[#allocation3 + $0x8d8] sm:$0xff]
    %v498 = vld [vmem:[#allocation3 + $0x8e0] sm:$0xff]
    %v499 = vld [vmem:[#allocation3 + $0x8e8] sm:$0xff]
    %v500 = vld [vmem:[#allocation3 + $0x8f0] sm:$0xff]
    %v501 = vld [vmem:[#allocation3 + $0x8f8] sm:$0xff]
    %v502 = vld [vmem:[#allocation3 + $0x900] sm:$0xff]
    %v503 = vld [vmem:[#allocation3 + $0x908] sm:$0xff]
    %v504 = vld [vmem:[#allocation3 + $0x910] sm:$0xff]
    %v505 = vld [vmem:[#allocation3 + $0x918] sm:$0xff]
    %v506 = vld [vmem:[#allocation3 + $0x920] sm:$0xff]
    %v507 = vld [vmem:[#allocation3 + $0x928] sm:$0xff]
    %v508 = vld [vmem:[#allocation3 + $0x930] sm:$0xff]
    %v509 = vld [vmem:[#allocation3 + $0x938] sm:$0xff]
    %v510 = vld [vmem:[#allocation3 + $0x940] sm:$0xff]
    %v511 = vld [vmem:[#allocation3 + $0x948] sm:$0xff]
    %v512 = vld [vmem:[#allocation3 + $0x950] sm:$0xff]
    %v513 = vld [vmem:[#allocation3 + $0x958] sm:$0xff]
    %v514 = vld [vmem:[#allocation3 + $0x960] sm:$0xff]
    %v515 = vld [vmem:[#allocation3 + $0x968] sm:$0xff]
    %v516 = vld [vmem:[#allocation3 + $0x970] sm:$0xff]
    %v517 = vld [vmem:[#allocation3 + $0x978] sm:$0xff]
    %v518 = vld [vmem:[#allocation3 + $0x980] sm:$0xff]
    %v519 = vld [vmem:[#allocation3 + $0x988] sm:$0xff]
    %v520 = vld [vmem:[#allocation3 + $0x990] sm:$0xff]
    %v521 = vld [vmem:[#allocation3 + $0x998] sm:$0xff]
    %v522 = vld [vmem:[#allocation3 + $0x9a0] sm:$0xff]
    %v523 = vld [vmem:[#allocation3 + $0x9a8] sm:$0xff]
    %v524 = vld [vmem:[#allocation3 + $0x9b0] sm:$0xff]
    %v525 = vld [vmem:[#allocation3 + $0x9b8] sm:$0xff]
    %v526 = vld [vmem:[#allocation3 + $0x9c0] sm:$0xff]
    %v527 = vld [vmem:[#allocation3 + $0x9c8] sm:$0xff]
    %v528 = vld [vmem:[#allocation3 + $0x9d0] sm:$0xff]
    %v529 = vld [vmem:[#allocation3 + $0x9d8] sm:$0xff]
    %v530 = vld [vmem:[#allocation3 + $0x9e0] sm:$0xff]
    %v531 = vld [vmem:[#allocation3 + $0x9e8] sm:$0xff]
    %v532 = vld [vmem:[#allocation3 + $0x9f0] sm:$0xff]
    %v533 = vld [vmem:[#allocation3 + $0x9f8] sm:$0xff]
    %v534 = vld [vmem:[#allocation3 + $0xa00] sm:$0xff]
    %v535 = vld [vmem:[#allocation3 + $0xa08] sm:$0xff]
    %v536 = vld [vmem:[#allocation3 + $0xa10] sm:$0xff]
    %v537 = vld [vmem:[#allocation3 + $0xa18] sm:$0xff]
    %v538 = vld [vmem:[#allocation3 + $0xa20] sm:$0xff]
    %v539 = vld [vmem:[#allocation3 + $0xa28] sm:$0xff]
    %v540 = vld [vmem:[#allocation3 + $0xa30] sm:$0xff]
    %v541 = vld [vmem:[#allocation3 + $0xa38] sm:$0xff]
    %v542 = vld [vmem:[#allocation3 + $0xa40] sm:$0xff]
    %v543 = vld [vmem:[#allocation3 + $0xa48] sm:$0xff]
    %v544 = vld [vmem:[#allocation3 + $0xa50] sm:$0xff]
    %v545 = vld [vmem:[#allocation3 + $0xa58] sm:$0xff]
    %v546 = vld [vmem:[#allocation3 + $0xa60] sm:$0xff]
    %v547 = vld [vmem:[#allocation3 + $0xa68] sm:$0xff]
    %v548 = vld [vmem:[#allocation3 + $0xa70] sm:$0xff]
    %v549 = vld [vmem:[#allocation3 + $0xa78] sm:$0xff]
    %v550 = vld [vmem:[#allocation3 + $0xa80] sm:$0xff]
    %v551 = vld [vmem:[#allocation3 + $0xa88] sm:$0xff]
    %v552 = vld [vmem:[#allocation3 + $0xa90] sm:$0xff]
    %v553 = vld [vmem:[#allocation3 + $0xa98] sm:$0xff]
    %v554 = vld [vmem:[#allocation3 + $0xaa0] sm:$0xff]
    %v555 = vld [vmem:[#allocation3 + $0xaa8] sm:$0xff]
    %v556 = vld [vmem:[#allocation3 + $0xab0] sm:$0xff]
    %v557 = vld [vmem:[#allocation3 + $0xab8] sm:$0xff]
    %v558 = vld [vmem:[#allocation3 + $0xac0] sm:$0xff]
    %v559 = vld [vmem:[#allocation3 + $0xac8] sm:$0xff]
    %v560 = vld [vmem:[#allocation3 + $0xad0] sm:$0xff]
    %v561 = vld [vmem:[#allocation3 + $0xad8] sm:$0xff]
    %v562 = vld [vmem:[#allocation3 + $0xae0] sm:$0xff]
    %v563 = vld [vmem:[#allocation3 + $0xae8] sm:$0xff]
    %v564 = vld [vmem:[#allocation3 + $0xaf0] sm:$0xff]
    %v565 = vld [vmem:[#allocation3 + $0xaf8] sm:$0xff]
    %v566 = vld [vmem:[#allocation3 + $0xb00] sm:$0xff]
    %v567 = vld [vmem:[#allocation3 + $0xb08] sm:$0xff]
    %v568 = vld [vmem:[#allocation3 + $0xb10] sm:$0xff]
    %v569 = vld [vmem:[#allocation3 + $0xb18] sm:$0xff]
    %v570 = vld [vmem:[#allocation3 + $0xb20] sm:$0xff]
    %v571 = vld [vmem:[#allocation3 + $0xb28] sm:$0xff]
    %v572 = vld [vmem:[#allocation3 + $0xb30] sm:$0xff]
    %v573 = vld [vmem:[#allocation3 + $0xb38] sm:$0xff]
    %v574 = vld [vmem:[#allocation3 + $0xb40] sm:$0xff]
    %v575 = vld [vmem:[#allocation3 + $0xb48] sm:$0xff]
    %v576 = vld [vmem:[#allocation3 + $0xb50] sm:$0xff]
    %v577 = vld [vmem:[#allocation3 + $0xb58] sm:$0xff]
    %v578 = vld [vmem:[#allocation3 + $0xb60] sm:$0xff]
    %v579 = vld [vmem:[#allocation3 + $0xb68] sm:$0xff]
    %v580 = vld [vmem:[#allocation3 + $0xb70] sm:$0xff]
    %v581 = vld [vmem:[#allocation3 + $0xb78] sm:$0xff]
    %v582 = vld [vmem:[#allocation3 + $0xb80] sm:$0xff]
    %v583 = vld [vmem:[#allocation3 + $0xb88] sm:$0xff]
    %v584 = vld [vmem:[#allocation3 + $0xb90] sm:$0xff]
    %v585 = vld [vmem:[#allocation3 + $0xb98] sm:$0xff]
    %v586 = vld [vmem:[#allocation3 + $0xba0] sm:$0xff]
    %v587 = vld [vmem:[#allocation3 + $0xba8] sm:$0xff]
    %v588 = vld [vmem:[#allocation3 + $0xbb0] sm:$0xff]
    %v589 = vld [vmem:[#allocation3 + $0xbb8] sm:$0xff]
    %v590 = vld [vmem:[#allocation3 + $0xbc0] sm:$0xff]
    %v591 = vld [vmem:[#allocation3 + $0xbc8] sm:$0xff]
    %v592 = vld [vmem:[#allocation3 + $0xbd0] sm:$0xff]
    %v593 = vld [vmem:[#allocation3 + $0xbd8] sm:$0xff]
    %v594 = vld [vmem:[#allocation3 + $0xbe0] sm:$0xff]
    %v595 = vld [vmem:[#allocation3 + $0xbe8] sm:$0xff]
    %v596 = vld [vmem:[#allocation3 + $0xbf0] sm:$0xff]
    %v597 = vld [vmem:[#allocation3 + $0xbf8] sm:$0xff]
    %v598 = vld [vmem:[#allocation3 + $0xc00] sm:$0xff]
    %v599 = vld [vmem:[#allocation3 + $0xc08] sm:$0xff]
    %v600 = vld [vmem:[#allocation3 + $0xc10] sm:$0xff]
    %v601 = vld [vmem:[#allocation3 + $0xc18] sm:$0xff]
    %v602 = vld [vmem:[#allocation3 + $0xc20] sm:$0xff]
    %v603 = vld [vmem:[#allocation3 + $0xc28] sm:$0xff]
    %v604 = vld [vmem:[#allocation3 + $0xc30] sm:$0xff]
    %v605 = vld [vmem:[#allocation3 + $0xc38] sm:$0xff]
    %v606 = vld [vmem:[#allocation3 + $0xc40] sm:$0xff]
    %v607 = vld [vmem:[#allocation3 + $0xc48] sm:$0xff]
    %v608 = vld [vmem:[#allocation3 + $0xc50] sm:$0xff]
    %v609 = vld [vmem:[#allocation3 + $0xc58] sm:$0xff]
    %v610 = vld [vmem:[#allocation3 + $0xc60] sm:$0xff]
    %v611 = vld [vmem:[#allocation3 + $0xc68] sm:$0xff]
    %v612 = vld [vmem:[#allocation3 + $0xc70] sm:$0xff]
    %v613 = vld [vmem:[#allocation3 + $0xc78] sm:$0xff]
    %v614 = vld [vmem:[#allocation3 + $0xc80] sm:$0xff]
    %v615 = vld [vmem:[#allocation3 + $0xc88] sm:$0xff]
    %v616 = vld [vmem:[#allocation3 + $0xc90] sm:$0xff]
    %v617 = vld [vmem:[#allocation3 + $0xc98] sm:$0xff]
    %v618 = vld [vmem:[#allocation3 + $0xca0] sm:$0xff]
    %v619 = vld [vmem:[#allocation3 + $0xca8] sm:$0xff]
    %v620 = vld [vmem:[#allocation3 + $0xcb0] sm:$0xff]
    %v621 = vld [vmem:[#allocation3 + $0xcb8] sm:$0xff]
    %v622 = vld [vmem:[#allocation3 + $0xcc0] sm:$0xff]
    %v623 = vld [vmem:[#allocation3 + $0xcc8] sm:$0xff]
    %v624 = vld [vmem:[#allocation3 + $0xcd0] sm:$0xff]
    %v625 = vld [vmem:[#allocation3 + $0xcd8] sm:$0xff]
    %v626 = vld [vmem:[#allocation3 + $0xce0] sm:$0xff]
    %v627 = vld [vmem:[#allocation3 + $0xce8] sm:$0xff]
    %v628 = vld [vmem:[#allocation3 + $0xcf0] sm:$0xff]
    %v629 = vld [vmem:[#allocation3 + $0xcf8] sm:$0xff]
    %v630 = vld [vmem:[#allocation3 + $0xd00] sm:$0xff]
    %v631 = vld [vmem:[#allocation3 + $0xd08] sm:$0xff]
    %v632 = vld [vmem:[#allocation3 + $0xd10] sm:$0xff]
    %v633 = vld [vmem:[#allocation3 + $0xd18] sm:$0xff]
    %v634 = vld [vmem:[#allocation3 + $0xd20] sm:$0xff]
    %v635 = vld [vmem:[#allocation3 + $0xd28] sm:$0xff]
    %v636 = vld [vmem:[#allocation3 + $0xd30] sm:$0xff]
    %v637 = vld [vmem:[#allocation3 + $0xd38] sm:$0xff]
    %v638 = vld [vmem:[#allocation3 + $0xd40] sm:$0xff]
    %v639 = vld [vmem:[#allocation3 + $0xd48] sm:$0xff]
    %v640 = vld [vmem:[#allocation3 + $0xd50] sm:$0xff]
    %v641 = vld [vmem:[#allocation3 + $0xd58] sm:$0xff]
    %v642 = vld [vmem:[#allocation3 + $0xd60] sm:$0xff]
    %v643 = vld [vmem:[#allocation3 + $0xd68] sm:$0xff]
    %v644 = vld [vmem:[#allocation3 + $0xd70] sm:$0xff]
    %v645 = vld [vmem:[#allocation3 + $0xd78] sm:$0xff]
    %v646 = vld [vmem:[#allocation3 + $0xd80] sm:$0xff]
    %v647 = vld [vmem:[#allocation3 + $0xd88] sm:$0xff]
    %v648 = vld [vmem:[#allocation3 + $0xd90] sm:$0xff]
    %v649 = vld [vmem:[#allocation3 + $0xd98] sm:$0xff]
    %v650 = vld [vmem:[#allocation3 + $0xda0] sm:$0xff]
    %v651 = vld [vmem:[#allocation3 + $0xda8] sm:$0xff]
    %v652 = vld [vmem:[#allocation3 + $0xdb0] sm:$0xff]
    %v653 = vld [vmem:[#allocation3 + $0xdb8] sm:$0xff]
    %v654 = vld [vmem:[#allocation3 + $0xdc0] sm:$0xff]
    %v655 = vld [vmem:[#allocation3 + $0xdc8] sm:$0xff]
    %v656 = vld [vmem:[#allocation3 + $0xdd0] sm:$0xff]
    %v657 = vld [vmem:[#allocation3 + $0xdd8] sm:$0xff]
    %v658 = vld [vmem:[#allocation3 + $0xde0] sm:$0xff]
    %v659 = vld [vmem:[#allocation3 + $0xde8] sm:$0xff]
    %v660 = vld [vmem:[#allocation3 + $0xdf0] sm:$0xff]
    %v661 = vld [vmem:[#allocation3 + $0xdf8] sm:$0xff]
    %v662 = vld [vmem:[#allocation3 + $0xe00] sm:$0xff]
    %v663 = vld [vmem:[#allocation3 + $0xe08] sm:$0xff]
    %v664 = vld [vmem:[#allocation3 + $0xe10] sm:$0xff]
    %v665 = vld [vmem:[#allocation3 + $0xe18] sm:$0xff]
    %v666 = vld [vmem:[#allocation3 + $0xe20] sm:$0xff]
    %v667 = vld [vmem:[#allocation3 + $0xe28] sm:$0xff]
    %v668 = vld [vmem:[#allocation3 + $0xe30] sm:$0xff]
    %v669 = vld [vmem:[#allocation3 + $0xe38] sm:$0xff]
    %v670 = vld [vmem:[#allocation3 + $0xe40] sm:$0xff]
    %v671 = vld [vmem:[#allocation3 + $0xe48] sm:$0xff]
    %v672 = vld [vmem:[#allocation3 + $0xe50] sm:$0xff]
    %v673 = vld [vmem:[#allocation3 + $0xe58] sm:$0xff]
    %v674 = vld [vmem:[#allocation3 + $0xe60] sm:$0xff]
    %v675 = vld [vmem:[#allocation3 + $0xe68] sm:$0xff]
    %v676 = vld [vmem:[#allocation3 + $0xe70] sm:$0xff]
    %v677 = vld [vmem:[#allocation3 + $0xe78] sm:$0xff]
    %v678 = vld [vmem:[#allocation3 + $0xe80] sm:$0xff]
    %v679 = vld [vmem:[#allocation3 + $0xe88] sm:$0xff]
    %v680 = vld [vmem:[#allocation3 + $0xe90] sm:$0xff]
    %v681 = vld [vmem:[#allocation3 + $0xe98] sm:$0xff]
    %v682 = vld [vmem:[#allocation3 + $0xea0] sm:$0xff]
    %v683 = vld [vmem:[#allocation3 + $0xea8] sm:$0xff]
    %v684 = vld [vmem:[#allocation3 + $0xeb0] sm:$0xff]
    %v685 = vld [vmem:[#allocation3 + $0xeb8] sm:$0xff]
    %v686 = vld [vmem:[#allocation3 + $0xec0] sm:$0xff]
    %v687 = vld [vmem:[#allocation3 + $0xec8] sm:$0xff]
    %v688 = vld [vmem:[#allocation3 + $0xed0] sm:$0xff]
    %v689 = vld [vmem:[#allocation3 + $0xed8] sm:$0xff]
    %v690 = vld [vmem:[#allocation3 + $0xee0] sm:$0xff]
    %v691 = vld [vmem:[#allocation3 + $0xee8] sm:$0xff]
    %v692 = vld [vmem:[#allocation3 + $0xef0] sm:$0xff]
    %v693 = vld [vmem:[#allocation3 + $0xef8] sm:$0xff]
    %v694 = vld [vmem:[#allocation3 + $0xf00] sm:$0xff]
    %v695 = vld [vmem:[#allocation3 + $0xf08] sm:$0xff]
    %v696 = vld [vmem:[#allocation3 + $0xf10] sm:$0xff]
    %v697 = vld [vmem:[#allocation3 + $0xf18] sm:$0xff]
    %v698 = vld [vmem:[#allocation3 + $0xf20] sm:$0xff]
    %v699 = vld [vmem:[#allocation3 + $0xf28] sm:$0xff]
    %v700 = vld [vmem:[#allocation3 + $0xf30] sm:$0xff]
    %v701 = vld [vmem:[#allocation3 + $0xf38] sm:$0xff]
    %v702 = vld [vmem:[#allocation3 + $0xf40] sm:$0xff]
    %v703 = vld [vmem:[#allocation3 + $0xf48] sm:$0xff]
    %v704 = vld [vmem:[#allocation3 + $0xf50] sm:$0xff]
    %v705 = vld [vmem:[#allocation3 + $0xf58] sm:$0xff]
    %v706 = vld [vmem:[#allocation3 + $0xf60] sm:$0xff]
    %v707 = vld [vmem:[#allocation3 + $0xf68] sm:$0xff]
    %v708 = vld [vmem:[#allocation3 + $0xf70] sm:$0xff]
    %v709 = vld [vmem:[#allocation3 + $0xf78] sm:$0xff]
    %v710 = vld [vmem:[#allocation3 + $0xf80] sm:$0xff]
    %v711 = vld [vmem:[#allocation3 + $0xf88] sm:$0xff]
    %v712 = vld [vmem:[#allocation3 + $0xf90] sm:$0xff]
    %v713 = vld [vmem:[#allocation3 + $0xf98] sm:$0xff]
    %v714 = vld [vmem:[#allocation3 + $0xfa0] sm:$0xff]
    %v715 = vld [vmem:[#allocation3 + $0xfa8] sm:$0xff]
    %v716 = vld [vmem:[#allocation3 + $0xfb0] sm:$0xff]
    %v717 = vld [vmem:[#allocation3 + $0xfb8] sm:$0xff]
    %v718 = vld [vmem:[#allocation3 + $0xfc0] sm:$0xff]
    %v719 = vld [vmem:[#allocation3 + $0xfc8] sm:$0xff]
    %v720 = vld [vmem:[#allocation3 + $0xfd0] sm:$0xff]
    %v721 = vld [vmem:[#allocation3 + $0xfd8] sm:$0xff]
    %v722 = vld [vmem:[#allocation3 + $0xfe0] sm:$0xff]
    %v723 = vld [vmem:[#allocation3 + $0xfe8] sm:$0xff]
    %v724 = vld [vmem:[#allocation3 + $0xff0] sm:$0xff]
    %v725 = vld [vmem:[#allocation3 + $0xff8] sm:$0xff]
    %v726 = vld [vmem:[#allocation3 + $0x1000] sm:$0xff]
    %v727 = vld [vmem:[#allocation3 + $0x1008] sm:$0xff]
    %v728 = vld [vmem:[#allocation3 + $0x1010] sm:$0xff]
    %v729 = vld [vmem:[#allocation3 + $0x1018] sm:$0xff]
    %v730 = vld [vmem:[#allocation3 + $0x1020] sm:$0xff]
    %v731 = vld [vmem:[#allocation3 + $0x1028] sm:$0xff]
    %v732 = vld [vmem:[#allocation3 + $0x1030] sm:$0xff]
    %v733 = vld [vmem:[#allocation3 + $0x1038] sm:$0xff]
    %v734 = vld [vmem:[#allocation3 + $0x1040] sm:$0xff]
    %v735 = vld [vmem:[#allocation3 + $0x1048] sm:$0xff]
    %v736 = vld [vmem:[#allocation3 + $0x1050] sm:$0xff]
    %v737 = vld [vmem:[#allocation3 + $0x1058] sm:$0xff]
    %v738 = vld [vmem:[#allocation3 + $0x1060] sm:$0xff]
    %v739 = vld [vmem:[#allocation3 + $0x1068] sm:$0xff]
    %v740 = vld [vmem:[#allocation3 + $0x1070] sm:$0xff]
    %v741 = vld [vmem:[#allocation3 + $0x1078] sm:$0xff]
    %v742 = vld [vmem:[#allocation3 + $0x1080] sm:$0xff]
    %v743 = vld [vmem:[#allocation3 + $0x1088] sm:$0xff]
    %v744 = vld [vmem:[#allocation3 + $0x1090] sm:$0xff]
    %v745 = vld [vmem:[#allocation3 + $0x1098] sm:$0xff]
    %v746 = vld [vmem:[#allocation3 + $0x10a0] sm:$0xff]
    %v747 = vld [vmem:[#allocation3 + $0x10a8] sm:$0xff]
    %v748 = vld [vmem:[#allocation3 + $0x10b0] sm:$0xff]
    %v749 = vld [vmem:[#allocation3 + $0x10b8] sm:$0xff]
    %v750 = vld [vmem:[#allocation3 + $0x10c0] sm:$0xff]
    %v751 = vld [vmem:[#allocation3 + $0x10c8] sm:$0xff]
    %v752 = vld [vmem:[#allocation3 + $0x10d0] sm:$0xff]
    %v753 = vld [vmem:[#allocation3 + $0x10d8] sm:$0xff]
    %v754 = vld [vmem:[#allocation3 + $0x10e0] sm:$0xff]
    %v755 = vld [vmem:[#allocation3 + $0x10e8] sm:$0xff]
    %v756 = vld [vmem:[#allocation3 + $0x10f0] sm:$0xff]
    %v757 = vld [vmem:[#allocation3 + $0x10f8] sm:$0xff]
    %v758 = vld [vmem:[#allocation3 + $0x1100] sm:$0xff]
    %v759 = vld [vmem:[#allocation3 + $0x1108] sm:$0xff]
    %v760 = vld [vmem:[#allocation3 + $0x1110] sm:$0xff]
    %v761 = vld [vmem:[#allocation3 + $0x1118] sm:$0xff]
    %v762 = vld [vmem:[#allocation3 + $0x1120] sm:$0xff]
    %v763 = vld [vmem:[#allocation3 + $0x1128] sm:$0xff]
    %v764 = vld [vmem:[#allocation3 + $0x1130] sm:$0xff]
    %v765 = vld [vmem:[#allocation3 + $0x1138] sm:$0xff]
    %v766 = vld [vmem:[#allocation3 + $0x1140] sm:$0xff]
    %v767 = vld [vmem:[#allocation3 + $0x1148] sm:$0xff]
    %v768 = vld [vmem:[#allocation3 + $0x1150] sm:$0xff]
    %v769 = vld [vmem:[#allocation3 + $0x1158] sm:$0xff]
    %v770 = vld [vmem:[#allocation3 + $0x1160] sm:$0xff]
    %v771 = vld [vmem:[#allocation3 + $0x1168] sm:$0xff]
    %v772 = vld [vmem:[#allocation3 + $0x1170] sm:$0xff]
    %v773 = vld [vmem:[#allocation3 + $0x1178] sm:$0xff]
    %v774 = vld [vmem:[#allocation3 + $0x1180] sm:$0xff]
    %v775 = vld [vmem:[#allocation3 + $0x1188] sm:$0xff]
    %v776 = vld [vmem:[#allocation3 + $0x1190] sm:$0xff]
    %v777 = vld [vmem:[#allocation3 + $0x1198] sm:$0xff]
    %v778 = vld [vmem:[#allocation3 + $0x11a0] sm:$0xff]
    %v779 = vld [vmem:[#allocation3 + $0x11a8] sm:$0xff]
    %v780 = vld [vmem:[#allocation3 + $0x11b0] sm:$0xff]
    %v781 = vld [vmem:[#allocation3 + $0x11b8] sm:$0xff]
    %v782 = vld [vmem:[#allocation3 + $0x11c0] sm:$0xff]
    %v783 = vld [vmem:[#allocation3 + $0x11c8] sm:$0xff]
    %v784 = vld [vmem:[#allocation3 + $0x11d0] sm:$0xff]
    %v785 = vld [vmem:[#allocation3 + $0x11d8] sm:$0xff]
    %v786 = vld [vmem:[#allocation3 + $0x11e0] sm:$0xff]
    %v787 = vld [vmem:[#allocation3 + $0x11e8] sm:$0xff]
    %v788 = vld [vmem:[#allocation3 + $0x11f0] sm:$0xff]
    %v789 = vld [vmem:[#allocation3 + $0x11f8] sm:$0xff]
    %790 = vmatprep.subr.mxu0 %v215
    %791 = vmatpush1.msra.mxu0 %v214
    %792 = vmatprep.subr.mxu0 %v224
    %793 = vmatpush1.msra.mxu0 %v223
    %794 = vmatprep.subr.mxu0 %v233
    %795 = vmatpush1.msra.mxu0 %v232
    %796 = vmatprep.subr.mxu0 %v242
    %797 = vmatpush1.msra.mxu0 %v241
    %798 = vmatprep.subr.mxu0 %v251
    %799 = vmatpush1.msra.mxu0 %v250
    %800 = vmatprep.subr.mxu0 %v260
    %801 = vmatpush1.msra.mxu0 %v259
    %802 = vmatprep.subr.mxu0 %v269
    %803 = vmatpush1.msra.mxu0 %v268
    %804 = vmatprep.subr.mxu0 %v278
    %805 = vmatpush1.msra.mxu0 %v277
    %806 = vmatprep.subr.mxu0 %v287
    %807 = vmatpush1.msra.mxu0 %v286
    %808 = vmatprep.subr.mxu0 %v296
    %809 = vmatpush1.msra.mxu0 %v295
    %810 = vmatprep.subr.mxu0 %v305
    %811 = vmatpush1.msra.mxu0 %v304
    %812 = vmatprep.subr.mxu0 %v314
    %813 = vmatpush1.msra.mxu0 %v313
    %814 = vmatprep.subr.mxu0 %v323
    %815 = vmatpush1.msra.mxu0 %v322
    %816 = vmatprep.subr.mxu0 %v332
    %817 = vmatpush1.msra.mxu0 %v331
    %818 = vmatprep.subr.mxu0 %v341
    %819 = vmatpush1.msra.mxu0 %v340
    %820 = vmatprep.subr.mxu0 %v350
    %821 = vmatpush1.msra.mxu0 %v349
    %822 = vmatprep.subr.mxu0 %v359
    %823 = vmatpush1.msra.mxu0 %v358
    %824 = vmatprep.subr.mxu0 %v368
    %825 = vmatpush1.msra.mxu0 %v367
    %826 = vmatprep.subr.mxu0 %v377
    %827 = vmatpush1.msra.mxu0 %v376
    %828 = vmatprep.subr.mxu0 %v386
    %829 = vmatpush1.msra.mxu0 %v385
    %830 = vmatprep.subr.mxu0 %v395
    %831 = vmatpush1.msra.mxu0 %v394
    %832 = vmatprep.subr.mxu0 %v404
    %833 = vmatpush1.msra.mxu0 %v403
    %834 = vmatprep.subr.mxu0 %v413
    %835 = vmatpush1.msra.mxu0 %v412
    %836 = vmatprep.subr.mxu0 %v422
    %837 = vmatpush1.msra.mxu0 %v421
    %838 = vmatprep.subr.mxu0 %v431
    %839 = vmatpush1.msra.mxu0 %v430
    %840 = vmatprep.subr.mxu0 %v440
    %841 = vmatpush1.msra.mxu0 %v439
    %842 = vmatprep.subr.mxu0 %v449
    %843 = vmatpush1.msra.mxu0 %v448
    %844 = vmatprep.subr.mxu0 %v458
    %845 = vmatpush1.msra.mxu0 %v457
    %846 = vmatprep.subr.mxu0 %v467
    %847 = vmatpush1.msra.mxu0 %v466
    %848 = vmatprep.subr.mxu0 %v476
    %849 = vmatpush1.msra.mxu0 %v475
    %850 = vmatprep.subr.mxu0 %v485
    %851 = vmatpush1.msra.mxu0 %v484
    %852 = vmatprep.subr.mxu0 %v494
    %853 = vmatpush1.msra.mxu0 %v493
    %854 = vmatprep.mubr.f32.mxu0 %v211
    %855 = vmatmul.mubr.f32.gmra.mrb[0].mxu0 %v210
    %v856 = vpop.f32.mrb[0].mxu0
    %v857 = vadd.f32 0.0, %v856
    %v858 = vpop.f32.mrb[0].mxu0
    %v859 = vadd.f32 0.0, %v858
    %860 = vdwg.mxu0
    %861 = vmatprep.subr.mxu0 %v503
    %862 = vmatpush1.msra.mxu0 %v502
    %863 = vmatprep.subr.mxu0 %v512
    %864 = vmatpush1.msra.mxu0 %v511
    %865 = vmatprep.subr.mxu0 %v521
    %866 = vmatpush1.msra.mxu0 %v520
    %867 = vmatprep.subr.mxu0 %v530
    %868 = vmatpush1.msra.mxu0 %v529
    %869 = vmatprep.subr.mxu0 %v539
    %870 = vmatpush1.msra.mxu0 %v538
    %871 = vmatprep.subr.mxu0 %v548
    %872 = vmatpush1.msra.mxu0 %v547
    %873 = vmatprep.subr.mxu0 %v557
    %874 = vmatpush1.msra.mxu0 %v556
    %875 = vmatprep.subr.mxu0 %v566
    %876 = vmatpush1.msra.mxu0 %v565
    %877 = vmatprep.subr.mxu0 %v575
    %878 = vmatpush1.msra.mxu0 %v574
    %879 = vmatprep.subr.mxu0 %v584
    %880 = vmatpush1.msra.mxu0 %v583
    %881 = vmatprep.subr.mxu0 %v593
    %882 = vmatpush1.msra.mxu0 %v592
    %883 = vmatprep.subr.mxu0 %v602
    %884 = vmatpush1.msra.mxu0 %v601
    %885 = vmatprep.subr.mxu0 %v611
    %886 = vmatpush1.msra.mxu0 %v610
    %887 = vmatprep.subr.mxu0 %v620
    %888 = vmatpush1.msra.mxu0 %v619
    %889 = vmatprep.subr.mxu0 %v629
    %890 = vmatpush1.msra.mxu0 %v628
    %891 = vmatprep.subr.mxu0 %v638
    %892 = vmatpush1.msra.mxu0 %v637
    %893 = vmatprep.subr.mxu0 %v647
    %894 = vmatpush1.msra.mxu0 %v646
    %895 = vmatprep.subr.mxu0 %v656
    %896 = vmatpush1.msra.mxu0 %v655
    %897 = vmatprep.subr.mxu0 %v665
    %898 = vmatpush1.msra.mxu0 %v664
    %899 = vmatprep.subr.mxu0 %v674
    %900 = vmatpush1.msra.mxu0 %v673
    %901 = vmatprep.subr.mxu0 %v683
    %902 = vmatpush1.msra.mxu0 %v682
    %903 = vmatprep.subr.mxu0 %v692
    %904 = vmatpush1.msra.mxu0 %v691
    %905 = vmatprep.subr.mxu0 %v701
    %906 = vmatpush1.msra.mxu0 %v700
    %907 = vmatprep.subr.mxu0 %v710
    %908 = vmatpush1.msra.mxu0 %v709
    %909 = vmatprep.subr.mxu0 %v719
    %910 = vmatpush1.msra.mxu0 %v718
    %911 = vmatprep.subr.mxu0 %v728
    %912 = vmatpush1.msra.mxu0 %v727
    %913 = vmatprep.subr.mxu0 %v737
    %914 = vmatpush1.msra.mxu0 %v736
    %915 = vmatprep.subr.mxu0 %v746
    %916 = vmatpush1.msra.mxu0 %v745
    %917 = vmatprep.subr.mxu0 %v755
    %918 = vmatpush1.msra.mxu0 %v754
    %919 = vmatprep.subr.mxu0 %v764
    %920 = vmatpush1.msra.mxu0 %v763
    %921 = vmatprep.subr.mxu0 %v773
    %922 = vmatpush1.msra.mxu0 %v772
    %923 = vmatprep.subr.mxu0 %v782
    %924 = vmatpush1.msra.mxu0 %v781
    %925 = vmatprep.mubr.f32.mxu0 %v213
    %926 = vmatmul.mubr.f32.gmra.mrb[0].mxu0 %v212
    %v927 = vpop.f32.mrb[0].mxu0
    %v928 = vadd.f32 %v857, %v927
    %v929 = vpop.f32.mrb[0].mxu0
    %v930 = vadd.f32 %v859, %v929
    %931 = vdwg.mxu0
    %932 = vmatprep.subr.mxu0 %v217
    %933 = vmatpush1.msra.mxu0 %v216
    %934 = vmatprep.subr.mxu0 %v226
    %935 = vmatpush1.msra.mxu0 %v225
    %936 = vmatprep.subr.mxu0 %v235
    %937 = vmatpush1.msra.mxu0 %v234
    %938 = vmatprep.subr.mxu0 %v244
    %939 = vmatpush1.msra.mxu0 %v243
    %940 = vmatprep.subr.mxu0 %v253
    %941 = vmatpush1.msra.mxu0 %v252
    %942 = vmatprep.subr.mxu0 %v262
    %943 = vmatpush1.msra.mxu0 %v261
    %944 = vmatprep.subr.mxu0 %v271
    %945 = vmatpush1.msra.mxu0 %v270
    %946 = vmatprep.subr.mxu0 %v280
    %947 = vmatpush1.msra.mxu0 %v279
    %948 = vmatprep.subr.mxu0 %v289
    %949 = vmatpush1.msra.mxu0 %v288
    %950 = vmatprep.subr.mxu0 %v298
    %951 = vmatpush1.msra.mxu0 %v297
    %952 = vmatprep.subr.mxu0 %v307
    %953 = vmatpush1.msra.mxu0 %v306
    %954 = vmatprep.subr.mxu0 %v316
    %955 = vmatpush1.msra.mxu0 %v315
    %956 = vmatprep.subr.mxu0 %v325
    %957 = vmatpush1.msra.mxu0 %v324
    %958 = vmatprep.subr.mxu0 %v334
    %959 = vmatpush1.msra.mxu0 %v333
    %960 = vmatprep.subr.mxu0 %v343
    %961 = vmatpush1.msra.mxu0 %v342
    %962 = vmatprep.subr.mxu0 %v352
    %963 = vmatpush1.msra.mxu0 %v351
    %964 = vmatprep.subr.mxu0 %v361
    %965 = vmatpush1.msra.mxu0 %v360
    %966 = vmatprep.subr.mxu0 %v370
    %967 = vmatpush1.msra.mxu0 %v369
    %968 = vmatprep.subr.mxu0 %v379
    %969 = vmatpush1.msra.mxu0 %v378
    %970 = vmatprep.subr.mxu0 %v388
    %971 = vmatpush1.msra.mxu0 %v387
    %972 = vmatprep.subr.mxu0 %v397
    %973 = vmatpush1.msra.mxu0 %v396
    %974 = vmatprep.subr.mxu0 %v406
    %975 = vmatpush1.msra.mxu0 %v405
    %976 = vmatprep.subr.mxu0 %v415
    %977 = vmatpush1.msra.mxu0 %v414
    %978 = vmatprep.subr.mxu0 %v424
    %979 = vmatpush1.msra.mxu0 %v423
    %980 = vmatprep.subr.mxu0 %v433
    %981 = vmatpush1.msra.mxu0 %v432
    %982 = vmatprep.subr.mxu0 %v442
    %983 = vmatpush1.msra.mxu0 %v441
    %984 = vmatprep.subr.mxu0 %v451
    %985 = vmatpush1.msra.mxu0 %v450
    %986 = vmatprep.subr.mxu0 %v460
    %987 = vmatpush1.msra.mxu0 %v459
    %988 = vmatprep.subr.mxu0 %v469
    %989 = vmatpush1.msra.mxu0 %v468
    %990 = vmatprep.subr.mxu0 %v478
    %991 = vmatpush1.msra.mxu0 %v477
    %992 = vmatprep.subr.mxu0 %v487
    %993 = vmatpush1.msra.mxu0 %v486
    %994 = vmatprep.subr.mxu0 %v496
    %995 = vmatpush1.msra.mxu0 %v495
    %996 = vmatprep.mubr.f32.mxu0 %v211
    %997 = vmatmul.mubr.f32.gmra.mrb[0].mxu0 %v210
    %v998 = vpop.f32.mrb[0].mxu0
    %v999 = vadd.f32 0.0, %v998
    %v1000 = vpop.f32.mrb[0].mxu0
    %v1001 = vadd.f32 0.0, %v1000
    %1002 = vdwg.mxu0
    %1003 = vmatprep.subr.mxu0 %v505
    %1004 = vmatpush1.msra.mxu0 %v504
    %1005 = vmatprep.subr.mxu0 %v514
    %1006 = vmatpush1.msra.mxu0 %v513
    %1007 = vmatprep.subr.mxu0 %v523
    %1008 = vmatpush1.msra.mxu0 %v522
    %1009 = vmatprep.subr.mxu0 %v532
    %1010 = vmatpush1.msra.mxu0 %v531
    %1011 = vmatprep.subr.mxu0 %v541
    %1012 = vmatpush1.msra.mxu0 %v540
    %1013 = vmatprep.subr.mxu0 %v550
    %1014 = vmatpush1.msra.mxu0 %v549
    %1015 = vmatprep.subr.mxu0 %v559
    %1016 = vmatpush1.msra.mxu0 %v558
    %1017 = vmatprep.subr.mxu0 %v568
    %1018 = vmatpush1.msra.mxu0 %v567
    %1019 = vmatprep.subr.mxu0 %v577
    %1020 = vmatpush1.msra.mxu0 %v576
    %1021 = vmatprep.subr.mxu0 %v586
    %1022 = vmatpush1.msra.mxu0 %v585
    %1023 = vmatprep.subr.mxu0 %v595
    %1024 = vmatpush1.msra.mxu0 %v594
    %1025 = vmatprep.subr.mxu0 %v604
    %1026 = vmatpush1.msra.mxu0 %v603
    %1027 = vmatprep.subr.mxu0 %v613
    %1028 = vmatpush1.msra.mxu0 %v612
    %1029 = vmatprep.subr.mxu0 %v622
    %1030 = vmatpush1.msra.mxu0 %v621
    %1031 = vmatprep.subr.mxu0 %v631
    %1032 = vmatpush1.msra.mxu0 %v630
    %1033 = vmatprep.subr.mxu0 %v640
    %1034 = vmatpush1.msra.mxu0 %v639
    %1035 = vmatprep.subr.mxu0 %v649
    %1036 = vmatpush1.msra.mxu0 %v648
    %1037 = vmatprep.subr.mxu0 %v658
    %1038 = vmatpush1.msra.mxu0 %v657
    %1039 = vmatprep.subr.mxu0 %v667
    %1040 = vmatpush1.msra.mxu0 %v666
    %1041 = vmatprep.subr.mxu0 %v676
    %1042 = vmatpush1.msra.mxu0 %v675
    %1043 = vmatprep.subr.mxu0 %v685
    %1044 = vmatpush1.msra.mxu0 %v684
    %1045 = vmatprep.subr.mxu0 %v694
    %1046 = vmatpush1.msra.mxu0 %v693
    %1047 = vmatprep.subr.mxu0 %v703
    %1048 = vmatpush1.msra.mxu0 %v702
    %1049 = vmatprep.subr.mxu0 %v712
    %1050 = vmatpush1.msra.mxu0 %v711
    %1051 = vmatprep.subr.mxu0 %v721
    %1052 = vmatpush1.msra.mxu0 %v720
    %1053 = vmatprep.subr.mxu0 %v730
    %1054 = vmatpush1.msra.mxu0 %v729
    %1055 = vmatprep.subr.mxu0 %v739
    %1056 = vmatpush1.msra.mxu0 %v738
    %1057 = vmatprep.subr.mxu0 %v748
    %1058 = vmatpush1.msra.mxu0 %v747
    %1059 = vmatprep.subr.mxu0 %v757
    %1060 = vmatpush1.msra.mxu0 %v756
    %1061 = vmatprep.subr.mxu0 %v766
    %1062 = vmatpush1.msra.mxu0 %v765
    %1063 = vmatprep.subr.mxu0 %v775
    %1064 = vmatpush1.msra.mxu0 %v774
    %1065 = vmatprep.subr.mxu0 %v784
    %1066 = vmatpush1.msra.mxu0 %v783
    %1067 = vmatprep.mubr.f32.mxu0 %v213
    %1068 = vmatmul.mubr.f32.gmra.mrb[0].mxu0 %v212
    %v1069 = vpop.f32.mrb[0].mxu0
    %v1070 = vadd.f32 %v999, %v1069
    %v1071 = vpop.f32.mrb[0].mxu0
    %v1072 = vadd.f32 %v1001, %v1071
    %1073 = vdwg.mxu0
    %1074 = vmatprep.subr.mxu0 %v219
    %1075 = vmatpush1.msra.mxu0 %v218
    %1076 = vmatprep.subr.mxu0 %v228
    %1077 = vmatpush1.msra.mxu0 %v227
    %1078 = vmatprep.subr.mxu0 %v237
    %1079 = vmatpush1.msra.mxu0 %v236
    %1080 = vmatprep.subr.mxu0 %v246
    %1081 = vmatpush1.msra.mxu0 %v245
    %1082 = vmatprep.subr.mxu0 %v255
    %1083 = vmatpush1.msra.mxu0 %v254
    %1084 = vmatprep.subr.mxu0 %v264
    %1085 = vmatpush1.msra.mxu0 %v263
    %1086 = vmatprep.subr.mxu0 %v273
    %1087 = vmatpush1.msra.mxu0 %v272
    %1088 = vmatprep.subr.mxu0 %v282
    %1089 = vmatpush1.msra.mxu0 %v281
    %1090 = vmatprep.subr.mxu0 %v291
    %1091 = vmatpush1.msra.mxu0 %v290
    %1092 = vmatprep.subr.mxu0 %v300
    %1093 = vmatpush1.msra.mxu0 %v299
    %1094 = vmatprep.subr.mxu0 %v309
    %1095 = vmatpush1.msra.mxu0 %v308
    %1096 = vmatprep.subr.mxu0 %v318
    %1097 = vmatpush1.msra.mxu0 %v317
    %1098 = vmatprep.subr.mxu0 %v327
    %1099 = vmatpush1.msra.mxu0 %v326
    %1100 = vmatprep.subr.mxu0 %v336
    %1101 = vmatpush1.msra.mxu0 %v335
    %1102 = vmatprep.subr.mxu0 %v345
    %1103 = vmatpush1.msra.mxu0 %v344
    %1104 = vmatprep.subr.mxu0 %v354
    %1105 = vmatpush1.msra.mxu0 %v353
    %1106 = vmatprep.subr.mxu0 %v363
    %1107 = vmatpush1.msra.mxu0 %v362
    %1108 = vmatprep.subr.mxu0 %v372
    %1109 = vmatpush1.msra.mxu0 %v371
    %1110 = vmatprep.subr.mxu0 %v381
    %1111 = vmatpush1.msra.mxu0 %v380
    %1112 = vmatprep.subr.mxu0 %v390
    %1113 = vmatpush1.msra.mxu0 %v389
    %1114 = vmatprep.subr.mxu0 %v399
    %1115 = vmatpush1.msra.mxu0 %v398
    %1116 = vmatprep.subr.mxu0 %v408
    %1117 = vmatpush1.msra.mxu0 %v407
    %1118 = vmatprep.subr.mxu0 %v417
    %1119 = vmatpush1.msra.mxu0 %v416
    %1120 = vmatprep.subr.mxu0 %v426
    %1121 = vmatpush1.msra.mxu0 %v425
    %1122 = vmatprep.subr.mxu0 %v435
    %1123 = vmatpush1.msra.mxu0 %v434
    %1124 = vmatprep.subr.mxu0 %v444
    %1125 = vmatpush1.msra.mxu0 %v443
    %1126 = vmatprep.subr.mxu0 %v453
    %1127 = vmatpush1.msra.mxu0 %v452
    %1128 = vmatprep.subr.mxu0 %v462
    %1129 = vmatpush1.msra.mxu0 %v461
    %1130 = vmatprep.subr.mxu0 %v471
    %1131 = vmatpush1.msra.mxu0 %v470
    %1132 = vmatprep.subr.mxu0 %v480
    %1133 = vmatpush1.msra.mxu0 %v479
    %1134 = vmatprep.subr.mxu0 %v489
    %1135 = vmatpush1.msra.mxu0 %v488
    %1136 = vmatprep.subr.mxu0 %v498
    %1137 = vmatpush1.msra.mxu0 %v497
    %1138 = vmatprep.mubr.f32.mxu0 %v211
    %1139 = vmatmul.mubr.f32.gmra.mrb[0].mxu0 %v210
    %v1140 = vpop.f32.mrb[0].mxu0
    %v1141 = vadd.f32 0.0, %v1140
    %v1142 = vpop.f32.mrb[0].mxu0
    %v1143 = vadd.f32 0.0, %v1142
    %1144 = vdwg.mxu0
    %1145 = vmatprep.subr.mxu0 %v507
    %1146 = vmatpush1.msra.mxu0 %v506
    %1147 = vmatprep.subr.mxu0 %v516
    %1148 = vmatpush1.msra.mxu0 %v515
    %1149 = vmatprep.subr.mxu0 %v525
    %1150 = vmatpush1.msra.mxu0 %v524
    %1151 = vmatprep.subr.mxu0 %v534
    %1152 = vmatpush1.msra.mxu0 %v533
    %1153 = vmatprep.subr.mxu0 %v543
    %1154 = vmatpush1.msra.mxu0 %v542
    %1155 = vmatprep.subr.mxu0 %v552
    %1156 = vmatpush1.msra.mxu0 %v551
    %1157 = vmatprep.subr.mxu0 %v561
    %1158 = vmatpush1.msra.mxu0 %v560
    %1159 = vmatprep.subr.mxu0 %v570
    %1160 = vmatpush1.msra.mxu0 %v569
    %1161 = vmatprep.subr.mxu0 %v579
    %1162 = vmatpush1.msra.mxu0 %v578
    %1163 = vmatprep.subr.mxu0 %v588
    %1164 = vmatpush1.msra.mxu0 %v587
    %1165 = vmatprep.subr.mxu0 %v597
    %1166 = vmatpush1.msra.mxu0 %v596
    %1167 = vmatprep.subr.mxu0 %v606
    %1168 = vmatpush1.msra.mxu0 %v605
    %1169 = vmatprep.subr.mxu0 %v615
    %1170 = vmatpush1.msra.mxu0 %v614
    %1171 = vmatprep.subr.mxu0 %v624
    %1172 = vmatpush1.msra.mxu0 %v623
    %1173 = vmatprep.subr.mxu0 %v633
    %1174 = vmatpush1.msra.mxu0 %v632
    %1175 = vmatprep.subr.mxu0 %v642
    %1176 = vmatpush1.msra.mxu0 %v641
    %1177 = vmatprep.subr.mxu0 %v651
    %1178 = vmatpush1.msra.mxu0 %v650
    %1179 = vmatprep.subr.mxu0 %v660
    %1180 = vmatpush1.msra.mxu0 %v659
    %1181 = vmatprep.subr.mxu0 %v669
    %1182 = vmatpush1.msra.mxu0 %v668
    %1183 = vmatprep.subr.mxu0 %v678
    %1184 = vmatpush1.msra.mxu0 %v677
    %1185 = vmatprep.subr.mxu0 %v687
    %1186 = vmatpush1.msra.mxu0 %v686
    %1187 = vmatprep.subr.mxu0 %v696
    %1188 = vmatpush1.msra.mxu0 %v695
    %1189 = vmatprep.subr.mxu0 %v705
    %1190 = vmatpush1.msra.mxu0 %v704
    %1191 = vmatprep.subr.mxu0 %v714
    %1192 = vmatpush1.msra.mxu0 %v713
    %1193 = vmatprep.subr.mxu0 %v723
    %1194 = vmatpush1.msra.mxu0 %v722
    %1195 = vmatprep.subr.mxu0 %v732
    %1196 = vmatpush1.msra.mxu0 %v731
    %1197 = vmatprep.subr.mxu0 %v741
    %1198 = vmatpush1.msra.mxu0 %v740
    %1199 = vmatprep.subr.mxu0 %v750
    %1200 = vmatpush1.msra.mxu0 %v749
    %1201 = vmatprep.subr.mxu0 %v759
    %1202 = vmatpush1.msra.mxu0 %v758
    %1203 = vmatprep.subr.mxu0 %v768
    %1204 = vmatpush1.msra.mxu0 %v767
    %1205 = vmatprep.subr.mxu0 %v777
    %1206 = vmatpush1.msra.mxu0 %v776
    %1207 = vmatprep.subr.mxu0 %v786
    %1208 = vmatpush1.msra.mxu0 %v785
    %1209 = vmatprep.mubr.f32.mxu0 %v213
    %1210 = vmatmul.mubr.f32.gmra.mrb[0].mxu0 %v212
    %v1211 = vpop.f32.mrb[0].mxu0
    %v1212 = vadd.f32 %v1141, %v1211
    %v1213 = vpop.f32.mrb[0].mxu0
    %v1214 = vadd.f32 %v1143, %v1213
    %1215 = vdwg.mxu0
    %1216 = vmatprep.subr.mxu0 %v221
    %1217 = vmatpush1.msra.mxu0 %v220
    %1218 = vmatprep.subr.mxu0 %v230
    %1219 = vmatpush1.msra.mxu0 %v229
    %1220 = vmatprep.subr.mxu0 %v239
    %1221 = vmatpush1.msra.mxu0 %v238
    %1222 = vmatprep.subr.mxu0 %v248
    %1223 = vmatpush1.msra.mxu0 %v247
    %1224 = vmatprep.subr.mxu0 %v257
    %1225 = vmatpush1.msra.mxu0 %v256
    %1226 = vmatprep.subr.mxu0 %v266
    %1227 = vmatpush1.msra.mxu0 %v265
    %1228 = vmatprep.subr.mxu0 %v275
    %1229 = vmatpush1.msra.mxu0 %v274
    %1230 = vmatprep.subr.mxu0 %v284
    %1231 = vmatpush1.msra.mxu0 %v283
    %1232 = vmatprep.subr.mxu0 %v293
    %1233 = vmatpush1.msra.mxu0 %v292
    %1234 = vmatprep.subr.mxu0 %v302
    %1235 = vmatpush1.msra.mxu0 %v301
    %1236 = vmatprep.subr.mxu0 %v311
    %1237 = vmatpush1.msra.mxu0 %v310
    %1238 = vmatprep.subr.mxu0 %v320
    %1239 = vmatpush1.msra.mxu0 %v319
    %1240 = vmatprep.subr.mxu0 %v329
    %1241 = vmatpush1.msra.mxu0 %v328
    %1242 = vmatprep.subr.mxu0 %v338
    %1243 = vmatpush1.msra.mxu0 %v337
    %1244 = vmatprep.subr.mxu0 %v347
    %1245 = vmatpush1.msra.mxu0 %v346
    %1246 = vmatprep.subr.mxu0 %v356
    %1247 = vmatpush1.msra.mxu0 %v355
    %1248 = vmatprep.subr.mxu0 %v365
    %1249 = vmatpush1.msra.mxu0 %v364
    %1250 = vmatprep.subr.mxu0 %v374
    %1251 = vmatpush1.msra.mxu0 %v373
    %1252 = vmatprep.subr.mxu0 %v383
    %1253 = vmatpush1.msra.mxu0 %v382
    %1254 = vmatprep.subr.mxu0 %v392
    %1255 = vmatpush1.msra.mxu0 %v391
    %1256 = vmatprep.subr.mxu0 %v401
    %1257 = vmatpush1.msra.mxu0 %v400
    %1258 = vmatprep.subr.mxu0 %v410
    %1259 = vmatpush1.msra.mxu0 %v409
    %1260 = vmatprep.subr.mxu0 %v419
    %1261 = vmatpush1.msra.mxu0 %v418
    %1262 = vmatprep.subr.mxu0 %v428
    %1263 = vmatpush1.msra.mxu0 %v427
    %1264 = vmatprep.subr.mxu0 %v437
    %1265 = vmatpush1.msra.mxu0 %v436
    %1266 = vmatprep.subr.mxu0 %v446
    %1267 = vmatpush1.msra.mxu0 %v445
    %1268 = vmatprep.subr.mxu0 %v455
    %1269 = vmatpush1.msra.mxu0 %v454
    %1270 = vmatprep.subr.mxu0 %v464
    %1271 = vmatpush1.msra.mxu0 %v463
    %1272 = vmatprep.subr.mxu0 %v473
    %1273 = vmatpush1.msra.mxu0 %v472
    %1274 = vmatprep.subr.mxu0 %v482
    %1275 = vmatpush1.msra.mxu0 %v481
    %1276 = vmatprep.subr.mxu0 %v491
    %1277 = vmatpush1.msra.mxu0 %v490
    %1278 = vmatprep.subr.mxu0 %v500
    %1279 = vmatpush1.msra.mxu0 %v499
    %1280 = vmatprep.mubr.f32.mxu0 %v211
    %1281 = vmatmul.mubr.f32.gmra.mrb[0].mxu0 %v210
    %v1282 = vpop.f32.mrb[0].mxu0
    %v1283 = vadd.f32 0.0, %v1282
    %v1284 = vpop.f32.mrb[0].mxu0
    %v1285 = vadd.f32 0.0, %v1284
    %1286 = vdwg.mxu0
    %1287 = vmatprep.subr.mxu0 %v509
    %1288 = vmatpush1.msra.mxu0 %v508
    %1289 = vmatprep.subr.mxu0 %v518
    %1290 = vmatpush1.msra.mxu0 %v517
    %1291 = vmatprep.subr.mxu0 %v527
    %1292 = vmatpush1.msra.mxu0 %v526
    %1293 = vmatprep.subr.mxu0 %v536
    %1294 = vmatpush1.msra.mxu0 %v535
    %1295 = vmatprep.subr.mxu0 %v545
    %1296 = vmatpush1.msra.mxu0 %v544
    %1297 = vmatprep.subr.mxu0 %v554
    %1298 = vmatpush1.msra.mxu0 %v553
    %1299 = vmatprep.subr.mxu0 %v563
    %1300 = vmatpush1.msra.mxu0 %v562
    %1301 = vmatprep.subr.mxu0 %v572
    %1302 = vmatpush1.msra.mxu0 %v571
    %1303 = vmatprep.subr.mxu0 %v581
    %1304 = vmatpush1.msra.mxu0 %v580
    %1305 = vmatprep.subr.mxu0 %v590
    %1306 = vmatpush1.msra.mxu0 %v589
    %1307 = vmatprep.subr.mxu0 %v599
    %1308 = vmatpush1.msra.mxu0 %v598
    %1309 = vmatprep.subr.mxu0 %v608
    %1310 = vmatpush1.msra.mxu0 %v607
    %1311 = vmatprep.subr.mxu0 %v617
    %1312 = vmatpush1.msra.mxu0 %v616
    %1313 = vmatprep.subr.mxu0 %v626
    %1314 = vmatpush1.msra.mxu0 %v625
    %1315 = vmatprep.subr.mxu0 %v635
    %1316 = vmatpush1.msra.mxu0 %v634
    %1317 = vmatprep.subr.mxu0 %v644
    %1318 = vmatpush1.msra.mxu0 %v643
    %1319 = vmatprep.subr.mxu0 %v653
    %1320 = vmatpush1.msra.mxu0 %v652
    %1321 = vmatprep.subr.mxu0 %v662
    %1322 = vmatpush1.msra.mxu0 %v661
    %1323 = vmatprep.subr.mxu0 %v671
    %1324 = vmatpush1.msra.mxu0 %v670
    %1325 = vmatprep.subr.mxu0 %v680
    %1326 = vmatpush1.msra.mxu0 %v679
    %1327 = vmatprep.subr.mxu0 %v689
    %1328 = vmatpush1.msra.mxu0 %v688
    %1329 = vmatprep.subr.mxu0 %v698
    %1330 = vmatpush1.msra.mxu0 %v697
    %1331 = vmatprep.subr.mxu0 %v707
    %1332 = vmatpush1.msra.mxu0 %v706
    %1333 = vmatprep.subr.mxu0 %v716
    %1334 = vmatpush1.msra.mxu0 %v715
    %1335 = vmatprep.subr.mxu0 %v725
    %1336 = vmatpush1.msra.mxu0 %v724
    %1337 = vmatprep.subr.mxu0 %v734
    %1338 = vmatpush1.msra.mxu0 %v733
    %1339 = vmatprep.subr.mxu0 %v743
    %1340 = vmatpush1.msra.mxu0 %v742
    %1341 = vmatprep.subr.mxu0 %v752
    %1342 = vmatpush1.msra.mxu0 %v751
    %1343 = vmatprep.subr.mxu0 %v761
    %1344 = vmatpush1.msra.mxu0 %v760
    %1345 = vmatprep.subr.mxu0 %v770
    %1346 = vmatpush1.msra.mxu0 %v769
    %1347 = vmatprep.subr.mxu0 %v779
    %1348 = vmatpush1.msra.mxu0 %v778
    %1349 = vmatprep.subr.mxu0 %v788
    %1350 = vmatpush1.msra.mxu0 %v787
    %1351 = vmatprep.mubr.f32.mxu0 %v213
    %1352 = vmatmul.mubr.f32.gmra.mrb[0].mxu0 %v212
    %v1353 = vpop.f32.mrb[0].mxu0
    %v1354 = vadd.f32 %v1283, %v1353
    %v1355 = vpop.f32.mrb[0].mxu0
    %v1356 = vadd.f32 %v1285, %v1355
    %1357 = vdwg.mxu0
    %1358 = vmatprep.subr.mxu0 0.0
    %1359 = vmatpush1.msra.mxu0 %v222
    %1360 = vmatprep.subr.mxu0 0.0
    %1361 = vmatpush1.msra.mxu0 %v231
    %1362 = vmatprep.subr.mxu0 0.0
    %1363 = vmatpush1.msra.mxu0 %v240
    %1364 = vmatprep.subr.mxu0 0.0
    %1365 = vmatpush1.msra.mxu0 %v249
    %1366 = vmatprep.subr.mxu0 0.0
    %1367 = vmatpush1.msra.mxu0 %v258
    %1368 = vmatprep.subr.mxu0 0.0
    %1369 = vmatpush1.msra.mxu0 %v267
    %1370 = vmatprep.subr.mxu0 0.0
    %1371 = vmatpush1.msra.mxu0 %v276
    %1372 = vmatprep.subr.mxu0 0.0
    %1373 = vmatpush1.msra.mxu0 %v285
    %1374 = vmatprep.subr.mxu0 0.0
    %1375 = vmatpush1.msra.mxu0 %v294
    %1376 = vmatprep.subr.mxu0 0.0
    %1377 = vmatpush1.msra.mxu0 %v303
    %1378 = vmatprep.subr.mxu0 0.0
    %1379 = vmatpush1.msra.mxu0 %v312
    %1380 = vmatprep.subr.mxu0 0.0
    %1381 = vmatpush1.msra.mxu0 %v321
    %1382 = vmatprep.subr.mxu0 0.0
    %1383 = vmatpush1.msra.mxu0 %v330
    %1384 = vmatprep.subr.mxu0 0.0
    %1385 = vmatpush1.msra.mxu0 %v339
    %1386 = vmatprep.subr.mxu0 0.0
    %1387 = vmatpush1.msra.mxu0 %v348
    %1388 = vmatprep.subr.mxu0 0.0
    %1389 = vmatpush1.msra.mxu0 %v357
    %1390 = vmatprep.subr.mxu0 0.0
    %1391 = vmatpush1.msra.mxu0 %v366
    %1392 = vmatprep.subr.mxu0 0.0
    %1393 = vmatpush1.msra.mxu0 %v375
    %1394 = vmatprep.subr.mxu0 0.0
    %1395 = vmatpush1.msra.mxu0 %v384
    %1396 = vmatprep.subr.mxu0 0.0
    %1397 = vmatpush1.msra.mxu0 %v393
    %1398 = vmatprep.subr.mxu0 0.0
    %1399 = vmatpush1.msra.mxu0 %v402
    %1400 = vmatprep.subr.mxu0 0.0
    %1401 = vmatpush1.msra.mxu0 %v411
    %1402 = vmatprep.subr.mxu0 0.0
    %1403 = vmatpush1.msra.mxu0 %v420
    %1404 = vmatprep.subr.mxu0 0.0
    %1405 = vmatpush1.msra.mxu0 %v429
    %1406 = vmatprep.subr.mxu0 0.0
    %1407 = vmatpush1.msra.mxu0 %v438
    %1408 = vmatprep.subr.mxu0 0.0
    %1409 = vmatpush1.msra.mxu0 %v447
    %1410 = vmatprep.subr.mxu0 0.0
    %1411 = vmatpush1.msra.mxu0 %v456
    %1412 = vmatprep.subr.mxu0 0.0
    %1413 = vmatpush1.msra.mxu0 %v465
    %1414 = vmatprep.subr.mxu0 0.0
    %1415 = vmatpush1.msra.mxu0 %v474
    %1416 = vmatprep.subr.mxu0 0.0
    %1417 = vmatpush1.msra.mxu0 %v483
    %1418 = vmatprep.subr.mxu0 0.0
    %1419 = vmatpush1.msra.mxu0 %v492
    %1420 = vmatprep.subr.mxu0 0.0
    %1421 = vmatpush1.msra.mxu0 %v501
    %1422 = vmatprep.mubr.f32.mxu0 %v211
    %1423 = vmatmul.mubr.f32.gmra.mrb[0].mxu0 %v210
    %v1424 = vpop.f32.mrb[0].mxu0
    %v1425 = vadd.f32 0.0, %v1424
    %v1426 = vpop.f32.mrb[0].mxu0
    %1427 = vdwg.mxu0
    %1428 = vmatprep.subr.mxu0 0.0
    %1429 = vmatpush1.msra.mxu0 %v510
    %1430 = vmatprep.subr.mxu0 0.0
    %1431 = vmatpush1.msra.mxu0 %v519
    %1432 = vmatprep.subr.mxu0 0.0
    %1433 = vmatpush1.msra.mxu0 %v528
    %1434 = vmatprep.subr.mxu0 0.0
    %1435 = vmatpush1.msra.mxu0 %v537
    %1436 = vmatprep.subr.mxu0 0.0
    %1437 = vmatpush1.msra.mxu0 %v546
    %1438 = vmatprep.subr.mxu0 0.0
    %1439 = vmatpush1.msra.mxu0 %v555
    %1440 = vmatprep.subr.mxu0 0.0
    %1441 = vmatpush1.msra.mxu0 %v564
    %1442 = vmatprep.subr.mxu0 0.0
    %1443 = vmatpush1.msra.mxu0 %v573
    %1444 = vmatprep.subr.mxu0 0.0
    %1445 = vmatpush1.msra.mxu0 %v582
    %1446 = vmatprep.subr.mxu0 0.0
    %1447 = vmatpush1.msra.mxu0 %v591
    %1448 = vmatprep.subr.mxu0 0.0
    %1449 = vmatpush1.msra.mxu0 %v600
    %1450 = vmatprep.subr.mxu0 0.0
    %1451 = vmatpush1.msra.mxu0 %v609
    %1452 = vmatprep.subr.mxu0 0.0
    %1453 = vmatpush1.msra.mxu0 %v618
    %1454 = vmatprep.subr.mxu0 0.0
    %1455 = vmatpush1.msra.mxu0 %v627
    %1456 = vmatprep.subr.mxu0 0.0
    %1457 = vmatpush1.msra.mxu0 %v636
    %1458 = vmatprep.subr.mxu0 0.0
    %1459 = vmatpush1.msra.mxu0 %v645
    %1460 = vmatprep.subr.mxu0 0.0
    %1461 = vmatpush1.msra.mxu0 %v654
    %1462 = vmatprep.subr.mxu0 0.0
    %1463 = vmatpush1.msra.mxu0 %v663
    %1464 = vmatprep.subr.mxu0 0.0
    %1465 = vmatpush1.msra.mxu0 %v672
    %1466 = vmatprep.subr.mxu0 0.0
    %1467 = vmatpush1.msra.mxu0 %v681
    %1468 = vmatprep.subr.mxu0 0.0
    %1469 = vmatpush1.msra.mxu0 %v690
    %1470 = vmatprep.subr.mxu0 0.0
    %1471 = vmatpush1.msra.mxu0 %v699
    %1472 = vmatprep.subr.mxu0 0.0
    %1473 = vmatpush1.msra.mxu0 %v708
    %1474 = vmatprep.subr.mxu0 0.0
    %1475 = vmatpush1.msra.mxu0 %v717
    %1476 = vmatprep.subr.mxu0 0.0
    %1477 = vmatpush1.msra.mxu0 %v726
    %1478 = vmatprep.subr.mxu0 0.0
    %1479 = vmatpush1.msra.mxu0 %v735
    %1480 = vmatprep.subr.mxu0 0.0
    %1481 = vmatpush1.msra.mxu0 %v744
    %1482 = vmatprep.subr.mxu0 0.0
    %1483 = vmatpush1.msra.mxu0 %v753
    %1484 = vmatprep.subr.mxu0 0.0
    %1485 = vmatpush1.msra.mxu0 %v762
    %1486 = vmatprep.subr.mxu0 0.0
    %1487 = vmatpush1.msra.mxu0 %v771
    %1488 = vmatprep.subr.mxu0 0.0
    %1489 = vmatpush1.msra.mxu0 %v780
    %1490 = vmatprep.subr.mxu0 0.0
    %1491 = vmatpush1.msra.mxu0 %v789
    %1492 = vmatprep.mubr.f32.mxu0 %v213
    %1493 = vmatmul.mubr.f32.gmra.mrb[0].mxu0 %v212
    %v1494 = vpop.f32.mrb[0].mxu0
    %v1495 = vadd.f32 %v1425, %v1494
    %v1496 = vpop.f32.mrb[0].mxu0
    %1497 = vdwg.mxu0
    %1498 = vst [vmem:[#allocation2] sm:$0xff] %v928
    %1499 = vst [vmem:[#allocation2 + $0x8] sm:$0xff] %v930
    %1500 = vst [vmem:[#allocation2 + $0x10] sm:$0xff] %v1070
    %1501 = vst [vmem:[#allocation2 + $0x18] sm:$0xff] %v1072
    %1502 = vst [vmem:[#allocation2 + $0x20] sm:$0xff] %v1212
    %1503 = vst [vmem:[#allocation2 + $0x28] sm:$0xff] %v1214
    %1504 = vst [vmem:[#allocation2 + $0x30] sm:$0xff] %v1354
    %1505 = vst [vmem:[#allocation2 + $0x38] sm:$0xff] %v1356
    %1506 = vst [vmem:[#allocation2 + $0x40] sm:$0xff] %v1495
    %v1507 = vld [vmem:[%s4] sm:$0xff]
    %v1508 = vld [vmem:[#allocation2] sm:$0xff]
    %v1509 = vld [vmem:[#allocation2 + $0x8] sm:$0xff]
    %v1510 = vld [vmem:[#allocation2 + $0x10] sm:$0xff]
    %v1511 = vld [vmem:[#allocation2 + $0x18] sm:$0xff]
    %v1512 = vld [vmem:[#allocation2 + $0x20] sm:$0xff]
    %v1513 = vld [vmem:[#allocation2 + $0x28] sm:$0xff]
    %v1514 = vld [vmem:[#allocation2 + $0x30] sm:$0xff]
    %v1515 = vld [vmem:[#allocation2 + $0x38] sm:$0xff]
    %v1516 = vld [vmem:[#allocation2 + $0x40] sm:$0xff]
    %v1517 = vld [vmem:[%s5] sm:$0xff]
    %1519 = vset.pattern.permute.xlu0 0
    %1520 = vperm.xlu0 %1519, %v1517
    %v1521 = vpop.permute.xlu0 %1520
    %vm1523 = vcmask 588800
    %v1525 = vsel %vm1523, %v1507, 0
    %1527 = vmatprep.subr.mxu0 0.0
    %1528 = vmatpush1.msra.mxu0 %v1508
    %1529 = vmatprep.subr.mxu0 0.0
    %1530 = vmatpush1.msra.mxu0 %v1509
    %1531 = vmatprep.subr.mxu0 0.0
    %1532 = vmatpush1.msra.mxu0 %v1510
    %1533 = vmatprep.subr.mxu0 0.0
    %1534 = vmatpush1.msra.mxu0 %v1511
    %1535 = vmatprep.subr.mxu0 0.0
    %1536 = vmatpush1.msra.mxu0 %v1512
    %1537 = vmatprep.subr.mxu0 0.0
    %1538 = vmatpush1.msra.mxu0 %v1513
    %1539 = vmatprep.subr.mxu0 0.0
    %1540 = vmatpush1.msra.mxu0 %v1514
    %1541 = vmatprep.subr.mxu0 0.0
    %1542 = vmatpush1.msra.mxu0 %v1515
    %1543 = vmatprep.subr.mxu0 0.0
    %1544 = vmatpush1.msra.mxu0 %v1516
    %1545 = vmatprep.subr.mxu0 0.0
    %1546 = vmatpush1.msra.mxu0 0.0
    %1547 = vmatprep.subr.mxu0 0.0
    %1548 = vmatpush1.msra.mxu0 0.0
    %1549 = vmatprep.subr.mxu0 0.0
    %1550 = vmatpush1.msra.mxu0 0.0
    %1551 = vmatprep.subr.mxu0 0.0
    %1552 = vmatpush1.msra.mxu0 0.0
    %1553 = vmatprep.subr.mxu0 0.0
    %1554 = vmatpush1.msra.mxu0 0.0
    %1555 = vmatprep.subr.mxu0 0.0
    %1556 = vmatpush1.msra.mxu0 0.0
    %1557 = vmatprep.subr.mxu0 0.0
    %1558 = vmatpush1.msra.mxu0 0.0
    %1559 = vmatprep.subr.mxu0 0.0
    %1560 = vmatpush1.msra.mxu0 0.0
    %1561 = vmatprep.subr.mxu0 0.0
    %1562 = vmatpush1.msra.mxu0 0.0
    %1563 = vmatprep.subr.mxu0 0.0
    %1564 = vmatpush1.msra.mxu0 0.0
    %1565 = vmatprep.subr.mxu0 0.0
    %1566 = vmatpush1.msra.mxu0 0.0
    %1567 = vmatprep.subr.mxu0 0.0
    %1568 = vmatpush1.msra.mxu0 0.0
    %1569 = vmatprep.subr.mxu0 0.0
    %1570 = vmatpush1.msra.mxu0 0.0
    %1571 = vmatprep.subr.mxu0 0.0
    %1572 = vmatpush1.msra.mxu0 0.0
    %1573 = vmatprep.subr.mxu0 0.0
    %1574 = vmatpush1.msra.mxu0 0.0
    %1575 = vmatprep.subr.mxu0 0.0
    %1576 = vmatpush1.msra.mxu0 0.0
    %1577 = vmatprep.subr.mxu0 0.0
    %1578 = vmatpush1.msra.mxu0 0.0
    %1579 = vmatprep.subr.mxu0 0.0
    %1580 = vmatpush1.msra.mxu0 0.0
    %1581 = vmatprep.subr.mxu0 0.0
    %1582 = vmatpush1.msra.mxu0 0.0
    %1583 = vmatprep.subr.mxu0 0.0
    %1584 = vmatpush1.msra.mxu0 0.0
    %1585 = vmatprep.subr.mxu0 0.0
    %1586 = vmatpush1.msra.mxu0 0.0
    %1587 = vmatprep.subr.mxu0 0.0
    %1588 = vmatpush1.msra.mxu0 0.0
    %1589 = vmatprep.subr.mxu0 0.0
    %1590 = vmatpush1.msra.mxu0 0.0
    %1591 = vmatprep.mubr.f32.mxu0 0.0
    %1592 = vmatmul.mubr.f32.gmra.mrb[0].mxu0 %v1525
    %v1593 = vpop.f32.mrb[0].mxu0
    %v1594 = vadd.f32 %v1521, %v1593
    %v1595 = vpop.f32.mrb[0].mxu0
    %1596 = vdwg.mxu0
    %v1597 = vmax.f32 %v1594, 0.0
    %v1598 = vld [vmem:[%s6] sm:$0xff]
    %v1599 = vld [vmem:[%s6 + $0x8] sm:$0xff]
    %v1600 = vld [vmem:[%s6 + $0x10] sm:$0xff]
    %v1601 = vld [vmem:[%s6 + $0x18] sm:$0xff]
    %v1602 = vld [vmem:[%s7] sm:$0xff]
    %v1603 = vld [vmem:[%s7 + $0x8] sm:$0xff]
    %v1604 = vld [vmem:[%s7 + $0x10] sm:$0xff]
    %v1605 = vld [vmem:[%s7 + $0x18] sm:$0xff]
    %1607 = vset.pattern.permute.xlu0 0
    %1608 = vperm.xlu0 %1607, %v1602
    %v1609 = vpop.permute.xlu0 %1608
    %1612 = vset.pattern.permute.xlu0 0
    %1613 = vperm.xlu0 %1612, %v1603
    %v1614 = vpop.permute.xlu0 %1613
    %1617 = vset.pattern.permute.xlu0 0
    %1618 = vperm.xlu0 %1617, %v1604
    %v1619 = vpop.permute.xlu0 %1618
    %1622 = vset.pattern.permute.xlu0 0
    %1623 = vperm.xlu0 %1622, %v1605
    %v1624 = vpop.permute.xlu0 %1623
    %vm1626 = vcmask 64512
    %v1628 = vsel %vm1626, %v1598, 0
    %v1631 = vsel %vm1626, %v1599, 0
    %v1634 = vsel %vm1626, %v1600, 0
    %v1637 = vsel %vm1626, %v1601, 0
    %1639 = vmatprep.subr.mxu0 0.0
    %1640 = vmatpush1.msra.mxu0 %v1597
    %1641 = vmatprep.subr.mxu0 0.0
    %1642 = vmatpush1.msra.mxu0 0.0
    %1643 = vmatprep.subr.mxu0 0.0
    %1644 = vmatpush1.msra.mxu0 0.0
    %1645 = vmatprep.subr.mxu0 0.0
    %1646 = vmatpush1.msra.mxu0 0.0
    %1647 = vmatprep.subr.mxu0 0.0
    %1648 = vmatpush1.msra.mxu0 0.0
    %1649 = vmatprep.subr.mxu0 0.0
    %1650 = vmatpush1.msra.mxu0 0.0
    %1651 = vmatprep.subr.mxu0 0.0
    %1652 = vmatpush1.msra.mxu0 0.0
    %1653 = vmatprep.subr.mxu0 0.0
    %1654 = vmatpush1.msra.mxu0 0.0
    %1655 = vmatprep.subr.mxu0 0.0
    %1656 = vmatpush1.msra.mxu0 0.0
    %1657 = vmatprep.subr.mxu0 0.0
    %1658 = vmatpush1.msra.mxu0 0.0
    %1659 = vmatprep.subr.mxu0 0.0
    %1660 = vmatpush1.msra.mxu0 0.0
    %1661 = vmatprep.subr.mxu0 0.0
    %1662 = vmatpush1.msra.mxu0 0.0
    %1663 = vmatprep.subr.mxu0 0.0
    %1664 = vmatpush1.msra.mxu0 0.0
    %1665 = vmatprep.subr.mxu0 0.0
    %1666 = vmatpush1.msra.mxu0 0.0
    %1667 = vmatprep.subr.mxu0 0.0
    %1668 = vmatpush1.msra.mxu0 0.0
    %1669 = vmatprep.subr.mxu0 0.0
    %1670 = vmatpush1.msra.mxu0 0.0
    %1671 = vmatprep.subr.mxu0 0.0
    %1672 = vmatpush1.msra.mxu0 0.0
    %1673 = vmatprep.subr.mxu0 0.0
    %1674 = vmatpush1.msra.mxu0 0.0
    %1675 = vmatprep.subr.mxu0 0.0
    %1676 = vmatpush1.msra.mxu0 0.0
    %1677 = vmatprep.subr.mxu0 0.0
    %1678 = vmatpush1.msra.mxu0 0.0
    %1679 = vmatprep.subr.mxu0 0.0
    %1680 = vmatpush1.msra.mxu0 0.0
    %1681 = vmatprep.subr.mxu0 0.0
    %1682 = vmatpush1.msra.mxu0 0.0
    %1683 = vmatprep.subr.mxu0 0.0
    %1684 = vmatpush1.msra.mxu0 0.0
    %1685 = vmatprep.subr.mxu0 0.0
    %1686 = vmatpush1.msra.mxu0 0.0
    %1687 = vmatprep.subr.mxu0 0.0
    %1688 = vmatpush1.msra.mxu0 0.0
    %1689 = vmatprep.subr.mxu0 0.0
    %1690 = vmatpush1.msra.mxu0 0.0
    %1691 = vmatprep.subr.mxu0 0.0
    %1692 = vmatpush1.msra.mxu0 0.0
    %1693 = vmatprep.subr.mxu0 0.0
    %1694 = vmatpush1.msra.mxu0 0.0
    %1695 = vmatprep.subr.mxu0 0.0
    %1696 = vmatpush1.msra.mxu0 0.0
    %1697 = vmatprep.subr.mxu0 0.0
    %1698 = vmatpush1.msra.mxu0 0.0
    %1699 = vmatprep.subr.mxu0 0.0
    %1700 = vmatpush1.msra.mxu0 0.0
    %1701 = vmatprep.subr.mxu0 0.0
    %1702 = vmatpush1.msra.mxu0 0.0
    %1703 = vmatprep.mubr.f32.mxu0 0.0
    %1704 = vmatmul.mubr.f32.gmra.mrb[0].mxu0 %v1628
    %v1705 = vpop.f32.mrb[0].mxu0
    %v1706 = vadd.f32 %v1609, %v1705
    %v1707 = vpop.f32.mrb[0].mxu0
    %1708 = vmatprep.mubr.f32.mxu0 0.0
    %1709 = vmatmul.mubr.f32.gmra.mrb[0].mxu0 %v1631
    %v1710 = vpop.f32.mrb[0].mxu0
    %v1711 = vadd.f32 %v1614, %v1710
    %v1712 = vpop.f32.mrb[0].mxu0
    %1713 = vmatprep.mubr.f32.mxu0 0.0
    %1714 = vmatmul.mubr.f32.gmra.mrb[0].mxu0 %v1634
    %v1715 = vpop.f32.mrb[0].mxu0
    %v1716 = vadd.f32 %v1619, %v1715
    %v1717 = vpop.f32.mrb[0].mxu0
    %1718 = vmatprep.mubr.f32.mxu0 0.0
    %1719 = vmatmul.mubr.f32.gmra.mrb[0].mxu0 %v1637
    %v1720 = vpop.f32.mrb[0].mxu0
    %v1721 = vadd.f32 %v1624, %v1720
    %v1722 = vpop.f32.mrb[0].mxu0
    %1723 = vdwg.mxu0
    %v1724 = vld [vmem:[#allocation3 + $0x20] sm:$0xff]
    %v1725 = vld [vmem:[#allocation3 + $0x68] sm:$0xff]
    %v1726 = vld [vmem:[#allocation3 + $0xb0] sm:$0xff]
    %v1727 = vld [vmem:[#allocation3 + $0xf8] sm:$0xff]
    %v1728 = vld [vmem:[#allocation3 + $0x140] sm:$0xff]
    %v1729 = vld [vmem:[#allocation3 + $0x188] sm:$0xff]
    %v1730 = vld [vmem:[#allocation3 + $0x1d0] sm:$0xff]
    %v1731 = vld [vmem:[#allocation3 + $0x218] sm:$0xff]
    %v1732 = vld [vmem:[#allocation3 + $0x260] sm:$0xff]
    %v1733 = vld [vmem:[#allocation3 + $0x2a8] sm:$0xff]
    %v1734 = vld [vmem:[#allocation3 + $0x2f0] sm:$0xff]
    %v1735 = vld [vmem:[#allocation3 + $0x338] sm:$0xff]
    %v1736 = vld [vmem:[#allocation3 + $0x380] sm:$0xff]
    %v1737 = vld [vmem:[#allocation3 + $0x3c8] sm:$0xff]
    %v1738 = vld [vmem:[#allocation3 + $0x410] sm:$0xff]
    %v1739 = vld [vmem:[#allocation3 + $0x458] sm:$0xff]
    %v1740 = vld [vmem:[#allocation3 + $0x4a0] sm:$0xff]
    %v1741 = vld [vmem:[#allocation3 + $0x4e8] sm:$0xff]
    %v1742 = vld [vmem:[#allocation3 + $0x530] sm:$0xff]
    %v1743 = vld [vmem:[#allocation3 + $0x578] sm:$0xff]
    %v1744 = vld [vmem:[#allocation3 + $0x5c0] sm:$0xff]
    %v1745 = vld [vmem:[#allocation3 + $0x608] sm:$0xff]
    %v1746 = vld [vmem:[#allocation3 + $0x650] sm:$0xff]
    %v1747 = vld [vmem:[#allocation3 + $0x698] sm:$0xff]
    %v1748 = vld [vmem:[#allocation3 + $0x6e0] sm:$0xff]
    %v1749 = vld [vmem:[#allocation3 + $0x728] sm:$0xff]
    %v1750 = vld [vmem:[#allocation3 + $0x770] sm:$0xff]
    %v1751 = vld [vmem:[#allocation3 + $0x7b8] sm:$0xff]
    %v1752 = vld [vmem:[#allocation3 + $0x800] sm:$0xff]
    %v1753 = vld [vmem:[#allocation3 + $0x848] sm:$0xff]
    %v1754 = vld [vmem:[#allocation3 + $0x890] sm:$0xff]
    %v1755 = vld [vmem:[#allocation3 + $0x8d8] sm:$0xff]
    %v1756 = vld [vmem:[#allocation3 + $0x920] sm:$0xff]
    %v1757 = vld [vmem:[#allocation3 + $0x968] sm:$0xff]
    %v1758 = vld [vmem:[#allocation3 + $0x9b0] sm:$0xff]
    %v1759 = vld [vmem:[#allocation3 + $0x9f8] sm:$0xff]
    %v1760 = vld [vmem:[#allocation3 + $0xa40] sm:$0xff]
    %v1761 = vld [vmem:[#allocation3 + $0xa88] sm:$0xff]
    %v1762 = vld [vmem:[#allocation3 + $0xad0] sm:$0xff]
    %v1763 = vld [vmem:[#allocation3 + $0xb18] sm:$0xff]
    %v1764 = vld [vmem:[#allocation3 + $0xb60] sm:$0xff]
    %v1765 = vld [vmem:[#allocation3 + $0xba8] sm:$0xff]
    %v1766 = vld [vmem:[#allocation3 + $0xbf0] sm:$0xff]
    %v1767 = vld [vmem:[#allocation3 + $0xc38] sm:$0xff]
    %v1768 = vld [vmem:[#allocation3 + $0xc80] sm:$0xff]
    %v1769 = vld [vmem:[#allocation3 + $0xcc8] sm:$0xff]
    %v1770 = vld [vmem:[#allocation3 + $0xd10] sm:$0xff]
    %v1771 = vld [vmem:[#allocation3 + $0xd58] sm:$0xff]
    %v1772 = vld [vmem:[#allocation3 + $0xda0] sm:$0xff]
    %v1773 = vld [vmem:[#allocation3 + $0xde8] sm:$0xff]
    %v1774 = vld [vmem:[#allocation3 + $0xe30] sm:$0xff]
    %v1775 = vld [vmem:[#allocation3 + $0xe78] sm:$0xff]
    %v1776 = vld [vmem:[#allocation3 + $0xec0] sm:$0xff]
    %v1777 = vld [vmem:[#allocation3 + $0xf08] sm:$0xff]
    %v1778 = vld [vmem:[#allocation3 + $0xf50] sm:$0xff]
    %v1779 = vld [vmem:[#allocation3 + $0xf98] sm:$0xff]
    %v1780 = vld [vmem:[#allocation3 + $0xfe0] sm:$0xff]
    %v1781 = vld [vmem:[#allocation3 + $0x1028] sm:$0xff]
    %v1782 = vld [vmem:[#allocation3 + $0x1070] sm:$0xff]
    %v1783 = vld [vmem:[#allocation3 + $0x10b8] sm:$0xff]
    %v1784 = vld [vmem:[#allocation3 + $0x1100] sm:$0xff]
    %v1785 = vld [vmem:[#allocation3 + $0x1148] sm:$0xff]
    %v1786 = vld [vmem:[#allocation3 + $0x1190] sm:$0xff]
    %v1787 = vld [vmem:[#allocation3 + $0x11d8] sm:$0xff]
    %1788 = vmatprep.subr.mxu0 0.0
    %1789 = vmatpush1.msra.mxu0 %v1724
    %1790 = vmatprep.subr.mxu0 0.0
    %1791 = vmatpush1.msra.mxu0 %v1725
    %1792 = vmatprep.subr.mxu0 0.0
    %1793 = vmatpush1.msra.mxu0 %v1726
    %1794 = vmatprep.subr.mxu0 0.0
    %1795 = vmatpush1.msra.mxu0 %v1727
    %1796 = vmatprep.subr.mxu0 0.0
    %1797 = vmatpush1.msra.mxu0 %v1728
    %1798 = vmatprep.subr.mxu0 0.0
    %1799 = vmatpush1.msra.mxu0 %v1729
    %1800 = vmatprep.subr.mxu0 0.0
    %1801 = vmatpush1.msra.mxu0 %v1730
    %1802 = vmatprep.subr.mxu0 0.0
    %1803 = vmatpush1.msra.mxu0 %v1731
    %1804 = vmatprep.subr.mxu0 0.0
    %1805 = vmatpush1.msra.mxu0 %v1732
    %1806 = vmatprep.subr.mxu0 0.0
    %1807 = vmatpush1.msra.mxu0 %v1733
    %1808 = vmatprep.subr.mxu0 0.0
    %1809 = vmatpush1.msra.mxu0 %v1734
    %1810 = vmatprep.subr.mxu0 0.0
    %1811 = vmatpush1.msra.mxu0 %v1735
    %1812 = vmatprep.subr.mxu0 0.0
    %1813 = vmatpush1.msra.mxu0 %v1736
    %1814 = vmatprep.subr.mxu0 0.0
    %1815 = vmatpush1.msra.mxu0 %v1737
    %1816 = vmatprep.subr.mxu0 0.0
    %1817 = vmatpush1.msra.mxu0 %v1738
    %1818 = vmatprep.subr.mxu0 0.0
    %1819 = vmatpush1.msra.mxu0 %v1739
    %1820 = vmatprep.subr.mxu0 0.0
    %1821 = vmatpush1.msra.mxu0 %v1740
    %1822 = vmatprep.subr.mxu0 0.0
    %1823 = vmatpush1.msra.mxu0 %v1741
    %1824 = vmatprep.subr.mxu0 0.0
    %1825 = vmatpush1.msra.mxu0 %v1742
    %1826 = vmatprep.subr.mxu0 0.0
    %1827 = vmatpush1.msra.mxu0 %v1743
    %1828 = vmatprep.subr.mxu0 0.0
    %1829 = vmatpush1.msra.mxu0 %v1744
    %1830 = vmatprep.subr.mxu0 0.0
    %1831 = vmatpush1.msra.mxu0 %v1745
    %1832 = vmatprep.subr.mxu0 0.0
    %1833 = vmatpush1.msra.mxu0 %v1746
    %1834 = vmatprep.subr.mxu0 0.0
    %1835 = vmatpush1.msra.mxu0 %v1747
    %1836 = vmatprep.subr.mxu0 0.0
    %1837 = vmatpush1.msra.mxu0 %v1748
    %1838 = vmatprep.subr.mxu0 0.0
    %1839 = vmatpush1.msra.mxu0 %v1749
    %1840 = vmatprep.subr.mxu0 0.0
    %1841 = vmatpush1.msra.mxu0 %v1750
    %1842 = vmatprep.subr.mxu0 0.0
    %1843 = vmatpush1.msra.mxu0 %v1751
    %1844 = vmatprep.subr.mxu0 0.0
    %1845 = vmatpush1.msra.mxu0 %v1752
    %1846 = vmatprep.subr.mxu0 0.0
    %1847 = vmatpush1.msra.mxu0 %v1753
    %1848 = vmatprep.subr.mxu0 0.0
    %1849 = vmatpush1.msra.mxu0 %v1754
    %1850 = vmatprep.subr.mxu0 0.0
    %1851 = vmatpush1.msra.mxu0 %v1755
    %1852 = vmatprep.mubr.f32.mxu0 %v50
    %1853 = vmatmul.mubr.f32.gmra.mrb[0].mxu0 %v49
    %v1854 = vpop.f32.mrb[0].mxu0
    %v1855 = vadd.f32 0.0, %v1854
    %v1856 = vpop.f32.mrb[0].mxu0
    %1857 = vmatprep.mubr.f32.mxu0 %v54
    %1858 = vmatmul.mubr.f32.gmra.mrb[0].mxu0 %v53
    %v1859 = vpop.f32.mrb[0].mxu0
    %v1860 = vadd.f32 0.0, %v1859
    %v1861 = vpop.f32.mrb[0].mxu0
    %1862 = vdwg.mxu0
    %1863 = vmatprep.subr.mxu0 0.0
    %1864 = vmatpush1.msra.mxu0 %v1756
    %1865 = vmatprep.subr.mxu0 0.0
    %1866 = vmatpush1.msra.mxu0 %v1757
    %1867 = vmatprep.subr.mxu0 0.0
    %1868 = vmatpush1.msra.mxu0 %v1758
    %1869 = vmatprep.subr.mxu0 0.0
    %1870 = vmatpush1.msra.mxu0 %v1759
    %1871 = vmatprep.subr.mxu0 0.0
    %1872 = vmatpush1.msra.mxu0 %v1760
    %1873 = vmatprep.subr.mxu0 0.0
    %1874 = vmatpush1.msra.mxu0 %v1761
    %1875 = vmatprep.subr.mxu0 0.0
    %1876 = vmatpush1.msra.mxu0 %v1762
    %1877 = vmatprep.subr.mxu0 0.0
    %1878 = vmatpush1.msra.mxu0 %v1763
    %1879 = vmatprep.subr.mxu0 0.0
    %1880 = vmatpush1.msra.mxu0 %v1764
    %1881 = vmatprep.subr.mxu0 0.0
    %1882 = vmatpush1.msra.mxu0 %v1765
    %1883 = vmatprep.subr.mxu0 0.0
    %1884 = vmatpush1.msra.mxu0 %v1766
    %1885 = vmatprep.subr.mxu0 0.0
    %1886 = vmatpush1.msra.mxu0 %v1767
    %1887 = vmatprep.subr.mxu0 0.0
    %1888 = vmatpush1.msra.mxu0 %v1768
    %1889 = vmatprep.subr.mxu0 0.0
    %1890 = vmatpush1.msra.mxu0 %v1769
    %1891 = vmatprep.subr.mxu0 0.0
    %1892 = vmatpush1.msra.mxu0 %v1770
    %1893 = vmatprep.subr.mxu0 0.0
    %1894 = vmatpush1.msra.mxu0 %v1771
    %1895 = vmatprep.subr.mxu0 0.0
    %1896 = vmatpush1.msra.mxu0 %v1772
    %1897 = vmatprep.subr.mxu0 0.0
    %1898 = vmatpush1.msra.mxu0 %v1773
    %1899 = vmatprep.subr.mxu0 0.0
    %1900 = vmatpush1.msra.mxu0 %v1774
    %1901 = vmatprep.subr.mxu0 0.0
    %1902 = vmatpush1.msra.mxu0 %v1775
    %1903 = vmatprep.subr.mxu0 0.0
    %1904 = vmatpush1.msra.mxu0 %v1776
    %1905 = vmatprep.subr.mxu0 0.0
    %1906 = vmatpush1.msra.mxu0 %v1777
    %1907 = vmatprep.subr.mxu0 0.0
    %1908 = vmatpush1.msra.mxu0 %v1778
    %1909 = vmatprep.subr.mxu0 0.0
    %1910 = vmatpush1.msra.mxu0 %v1779
    %1911 = vmatprep.subr.mxu0 0.0
    %1912 = vmatpush1.msra.mxu0 %v1780
    %1913 = vmatprep.subr.mxu0 0.0
    %1914 = vmatpush1.msra.mxu0 %v1781
    %1915 = vmatprep.subr.mxu0 0.0
    %1916 = vmatpush1.msra.mxu0 %v1782
    %1917 = vmatprep.subr.mxu0 0.0
    %1918 = vmatpush1.msra.mxu0 %v1783
    %1919 = vmatprep.subr.mxu0 0.0
    %1920 = vmatpush1.msra.mxu0 %v1784
    %1921 = vmatprep.subr.mxu0 0.0
    %1922 = vmatpush1.msra.mxu0 %v1785
    %1923 = vmatprep.subr.mxu0 0.0
    %1924 = vmatpush1.msra.mxu0 %v1786
    %1925 = vmatprep.subr.mxu0 0.0
    %1926 = vmatpush1.msra.mxu0 %v1787
    %1927 = vmatprep.mubr.f32.mxu0 %v52
    %1928 = vmatmul.mubr.f32.gmra.mrb[0].mxu0 %v51
    %v1929 = vpop.f32.mrb[0].mxu0
    %v1930 = vadd.f32 %v1855, %v1929
    %v1931 = vpop.f32.mrb[0].mxu0
    %1932 = vmatprep.mubr.f32.mxu0 %v56
    %1933 = vmatmul.mubr.f32.gmra.mrb[0].mxu0 %v55
    %v1934 = vpop.f32.mrb[0].mxu0
    %v1935 = vadd.f32 %v1860, %v1934
    %v1936 = vpop.f32.mrb[0].mxu0
    %1937 = vdwg.mxu0
    %v1938 = vld [vmem:[%s8] sm:$0xff]
    %v1939 = vld [vmem:[%s8 + $0x8] sm:$0xff]
    %v1940 = vld [vmem:[%s8 + $0x10] sm:$0xff]
    %v1941 = vld [vmem:[%s8 + $0x18] sm:$0xff]
    %v1942 = vld [vmem:[%s9] sm:$0xff]
    %v1943 = vld [vmem:[%s9 + $0x8] sm:$0xff]
    %v1944 = vld [vmem:[%s9 + $0x10] sm:$0xff]
    %v1945 = vld [vmem:[%s9 + $0x18] sm:$0xff]
    %1947 = vset.pattern.permute.xlu0 0
    %1948 = vperm.xlu0 %1947, %v1942
    %v1949 = vpop.permute.xlu0 %1948
    %1952 = vset.pattern.permute.xlu0 0
    %1953 = vperm.xlu0 %1952, %v1943
    %v1954 = vpop.permute.xlu0 %1953
    %1957 = vset.pattern.permute.xlu0 0
    %1958 = vperm.xlu0 %1957, %v1944
    %v1959 = vpop.permute.xlu0 %1958
    %1962 = vset.pattern.permute.xlu0 0
    %1963 = vperm.xlu0 %1962, %v1945
    %v1964 = vpop.permute.xlu0 %1963
    %v1967 = vsel %vm64, %v1938, 0
    %v1970 = vsel %vm64, %v1939, 0
    %v1973 = vsel %vm64, %v1940, 0
    %v1976 = vsel %vm64, %v1941, 0
    %1978 = vmatprep.subr.mxu0 0.0
    %1979 = vmatpush1.msra.mxu0 %v1930
    %1980 = vmatprep.subr.mxu0 0.0
    %1981 = vmatpush1.msra.mxu0 %v1935
    %1982 = vmatprep.subr.mxu0 0.0
    %1983 = vmatpush1.msra.mxu0 0.0
    %1984 = vmatprep.subr.mxu0 0.0
    %1985 = vmatpush1.msra.mxu0 0.0
    %1986 = vmatprep.subr.mxu0 0.0
    %1987 = vmatpush1.msra.mxu0 0.0
    %1988 = vmatprep.subr.mxu0 0.0
    %1989 = vmatpush1.msra.mxu0 0.0
    %1990 = vmatprep.subr.mxu0 0.0
    %1991 = vmatpush1.msra.mxu0 0.0
    %1992 = vmatprep.subr.mxu0 0.0
    %1993 = vmatpush1.msra.mxu0 0.0
    %1994 = vmatprep.subr.mxu0 0.0
    %1995 = vmatpush1.msra.mxu0 0.0
    %1996 = vmatprep.subr.mxu0 0.0
    %1997 = vmatpush1.msra.mxu0 0.0
    %1998 = vmatprep.subr.mxu0 0.0
    %1999 = vmatpush1.msra.mxu0 0.0
    %2000 = vmatprep.subr.mxu0 0.0
    %2001 = vmatpush1.msra.mxu0 0.0
    %2002 = vmatprep.subr.mxu0 0.0
    %2003 = vmatpush1.msra.mxu0 0.0
    %2004 = vmatprep.subr.mxu0 0.0
    %2005 = vmatpush1.msra.mxu0 0.0
    %2006 = vmatprep.subr.mxu0 0.0
    %2007 = vmatpush1.msra.mxu0 0.0
    %2008 = vmatprep.subr.mxu0 0.0
    %2009 = vmatpush1.msra.mxu0 0.0
    %2010 = vmatprep.subr.mxu0 0.0
    %2011 = vmatpush1.msra.mxu0 0.0
    %2012 = vmatprep.subr.mxu0 0.0
    %2013 = vmatpush1.msra.mxu0 0.0
    %2014 = vmatprep.subr.mxu0 0.0
    %2015 = vmatpush1.msra.mxu0 0.0
    %2016 = vmatprep.subr.mxu0 0.0
    %2017 = vmatpush1.msra.mxu0 0.0
    %2018 = vmatprep.subr.mxu0 0.0
    %2019 = vmatpush1.msra.mxu0 0.0
    %2020 = vmatprep.subr.mxu0 0.0
    %2021 = vmatpush1.msra.mxu0 0.0
    %2022 = vmatprep.subr.mxu0 0.0
    %2023 = vmatpush1.msra.mxu0 0.0
    %2024 = vmatprep.subr.mxu0 0.0
    %2025 = vmatpush1.msra.mxu0 0.0
    %2026 = vmatprep.subr.mxu0 0.0
    %2027 = vmatpush1.msra.mxu0 0.0
    %2028 = vmatprep.subr.mxu0 0.0
    %2029 = vmatpush1.msra.mxu0 0.0
    %2030 = vmatprep.subr.mxu0 0.0
    %2031 = vmatpush1.msra.mxu0 0.0
    %2032 = vmatprep.subr.mxu0 0.0
    %2033 = vmatpush1.msra.mxu0 0.0
    %2034 = vmatprep.subr.mxu0 0.0
    %2035 = vmatpush1.msra.mxu0 0.0
    %2036 = vmatprep.subr.mxu0 0.0
    %2037 = vmatpush1.msra.mxu0 0.0
    %2038 = vmatprep.subr.mxu0 0.0
    %2039 = vmatpush1.msra.mxu0 0.0
    %2040 = vmatprep.subr.mxu0 0.0
    %2041 = vmatpush1.msra.mxu0 0.0
    %2042 = vmatprep.mubr.f32.mxu0 0.0
    %2043 = vmatmul.mubr.f32.gmra.mrb[0].mxu0 %v1967
    %v2044 = vpop.f32.mrb[0].mxu0
    %v2045 = vadd.f32 %v1949, %v2044
    %v2046 = vpop.f32.mrb[0].mxu0
    %2047 = vmatprep.mubr.f32.mxu0 0.0
    %2048 = vmatmul.mubr.f32.gmra.mrb[0].mxu0 %v1970
    %v2049 = vpop.f32.mrb[0].mxu0
    %v2050 = vadd.f32 %v1954, %v2049
    %v2051 = vpop.f32.mrb[0].mxu0
    %2052 = vmatprep.mubr.f32.mxu0 0.0
    %2053 = vmatmul.mubr.f32.gmra.mrb[0].mxu0 %v1973
    %v2054 = vpop.f32.mrb[0].mxu0
    %v2055 = vadd.f32 %v1959, %v2054
    %v2056 = vpop.f32.mrb[0].mxu0
    %2057 = vmatprep.mubr.f32.mxu0 0.0
    %2058 = vmatmul.mubr.f32.gmra.mrb[0].mxu0 %v1976
    %v2059 = vpop.f32.mrb[0].mxu0
    %v2060 = vadd.f32 %v1964, %v2059
    %v2061 = vpop.f32.mrb[0].mxu0
    %2062 = vdwg.mxu0
    %v2063 = vadd.f32 %v1706, %v2045
    %v2064 = vadd.f32 %v1711, %v2050
    %v2065 = vadd.f32 %v1716, %v2055
    %v2066 = vadd.f32 %v1721, %v2060
    %v2067 = vmax.f32 %v2063, 0.0
    %v2068 = vmax.f32 %v2064, 0.0
    %v2069 = vmax.f32 %v2065, 0.0
    %v2070 = vmax.f32 %v2066, 0.0
    %2071 = vst [vmem:[%s10] sm:$0xff] %v2067
    %2072 = vst [vmem:[%s10 + $0x8] sm:$0xff] %v2068
    %2073 = vst [vmem:[%s10 + $0x10] sm:$0xff] %v2069
    %2074 = vst [vmem:[%s10 + $0x18] sm:$0xff] %v2070
    // Predicated region
    $region46: #{bottleneck_forward.1} parent=1 // pred_check
      _
    $region47: #{bottleneck_forward.1} parent=1 // pred_check_branch
      %2076 = sbr.rel (0) target = $region49
    $region48: #{bottleneck_forward.1} parent=1 // pred_region
      _
    $region49: #{bottleneck_forward.1} parent=1 // pred_fallthru
      _
    // Predicated region
    $region50: #{bottleneck_forward.1} parent=1 // pred_check
      _
    $region51: #{bottleneck_forward.1} parent=1 // pred_check_branch
      %2078 = sbr.rel (0) target = $region53
    $region52: #{bottleneck_forward.1} parent=1 // pred_region
      _
    $region53: #{bottleneck_forward.1} parent=1 // pred_fallthru
      _
    %2079 = vsyncpa [#allocation4], 1

</llo_original>
